<compile_context>
chip_gen: v6e
topology: v6e:2x2x1
jax: 0.10.0
libtpu: 0.0.40
codegen_flags: <defaults>
</compile_context>

<pallas_src>
import jax
import jax.numpy as jnp
from jax.experimental import pallas as pl
from jax.experimental.pallas import tpu as pltpu


BATCH_TILE = 128  # batch elements (lanes) per grid step


# ---------------------------------------------------------------------------
# Fused Pallas kernel: one grid step == one batch tile (batch on lanes)
# ---------------------------------------------------------------------------
def _make_fused_kernel(num_blocks, H, F, nc, widths):
    def kernel(*refs):
        x_ref = refs[0]                                      # (H, W0, Nb) f32
        w_refs = refs[1:1 + num_blocks]                      # banded conv (Wout*F, Win*C) bf16
        b_refs = refs[1 + num_blocks:1 + 2 * num_blocks]     # fused conv+BN bias (Wout*F, 1) f32
        wlin_ref = refs[1 + 2 * num_blocks]                  # (H, nc, Wlast*F) bf16
        blin_ref = refs[2 + 2 * num_blocks]                  # (nc, 1) f32
        out_ref = refs[3 + 2 * num_blocks]                   # (nc, Nb) f32
        feat_refs = refs[4 + 2 * num_blocks:]                # (H, F, Nb) f32, one per block

        nb = x_ref.shape[-1]

        # Hoisted out of the loops (JAX does not CSE broadcast_in_dim).
        w_mats = [w_refs[b][...] for b in range(num_blocks)]
        biases = [jnp.broadcast_to(b_refs[b][...], (widths[b + 1] * F, nb))
                  for b in range(num_blocks)]
        wlin = wlin_ref[...]
        logits = jnp.broadcast_to(blin_ref[...], (nc, nb))   # f32 accumulator, bias included

        for h in range(H):                                   # EMG channels (tiny)
            a = x_ref[h]                                     # (W0, Nb) f32, rows = width, C_in = 1
            for b in range(num_blocks):
                w_out = widths[b + 1]
                # Conv(1,kw)+BatchNorm(eval) = one banded matmul; batch on lanes, f32 accumulate.
                z = jnp.dot(w_mats[b], a.astype(jnp.bfloat16),
                            preferred_element_type=jnp.float32) + biases[b]
                a = jnp.where(z > 0.0, z, 0.1 * z)           # LeakyReLU(0.1); rows = (w, f)
                # TODO(synk): Dropout2d(p=0.5) is identity in eval mode; training-mode RNG drop not modeled.
                # torch.mean(x, dim=3): mean over width -> (F, Nb), lane-dense store.
                s = a[0:F, :]
                for w in range(1, w_out):
                    s = s + a[w * F:(w + 1) * F, :]
                feat_refs[b][h, :, :] = s * (1.0 / w_out)
            # Linear head contribution of EMG channel h (accumulated over h).
            logits = logits + jnp.dot(wlin[h], a.astype(jnp.bfloat16),
                                      preferred_element_type=jnp.float32)

        out_ref[...] = logits                                # (nc, Nb) lane-dense store

    return kernel


# ---------------------------------------------------------------------------
# One-time host-side parameter packing (hoisted out of the forward path)
# ---------------------------------------------------------------------------
def prepare_params(params, H, W0):
    blocks = params["blocks"]
    nbk = len(blocks)
    F = blocks[0]["w"].shape[0]
    kw = blocks[0]["w"].shape[-1]
    nc = params["w_out"].shape[0]
    widths = [W0]
    for _ in range(nbk):
        widths.append(widths[-1] - kw + 1)
    w_last = widths[-1]

    w_list, b_list = [], []
    for i, blk in enumerate(blocks):
        cout, cin, _, kwb = blk["w"].shape
        # Module spec: nn.BatchNorm2d(..., eps=0.001)
        scale = blk["gamma"] * jax.lax.rsqrt(blk["var"] + 1e-3)
        wfold = blk["w"][:, :, 0, :] * scale[:, None, None]          # (F, Cin, Kw), BN scale folded
        bias = (blk["b"] - blk["mean"]) * scale + blk["beta"]        # fused conv+BN bias
        w_in, w_out = widths[i], widths[i + 1]
        # Banded (Toeplitz) conv matrix: rows (w', f), cols (w, c) -> whole conv is one matmul.
        big = jnp.zeros((w_out * cout, w_in * cin), jnp.float32)
        for wp in range(w_out):
            for k in range(kwb):
                big = big.at[wp * cout:(wp + 1) * cout,
                             (wp + k) * cin:(wp + k + 1) * cin].set(wfold[:, :, k])
        w_list.append(big.astype(jnp.bfloat16))
        b_list.append(jnp.tile(bias, w_out).reshape(w_out * cout, 1).astype(jnp.float32))

    # Linear head: PyTorch flattens NCHW as (f, h, w); kernel activation rows are (w, f) per h.
    wl = params["w_out"].reshape(nc, F, H, w_last)                   # (nc, f, h, w)
    wl = jnp.transpose(wl, (2, 0, 3, 1)).reshape(H, nc, w_last * F)  # (h, nc, (w, f))
    wlin = wl.astype(jnp.bfloat16)
    blin = params["b_out"].reshape(nc, 1).astype(jnp.float32)

    return dict(w_list=w_list, b_list=b_list, wlin=wlin, blin=blin,
                H=H, W0=W0, F=F, num_blocks=nbk, num_class=nc, kw=kw, widths=widths)


# ---------------------------------------------------------------------------
# Forward pass (single fused pallas_call, batch-tiled grid)
# ---------------------------------------------------------------------------
def model_forward(x, prep):
    """Replicates Model.forward(x, lambda_value=None) in eval mode."""
    N = x.shape[0]
    H, W0 = prep["H"], prep["W0"]
    F, nbk, nc = prep["F"], prep["num_blocks"], prep["num_class"]
    widths = prep["widths"]

    nb = BATCH_TILE
    n_pad = ((N + nb - 1) // nb) * nb
    # Lane-dense batch-last layout: one tiny fused XLA transpose over the whole (KB-scale)
    # input, amortized across all grid steps; everything in-kernel is then lane-dense.
    xt = jnp.transpose(x[:, 0, :, :], (1, 2, 0)).astype(jnp.float32)   # (H, W0, N)
    if n_pad != N:
        xt = jnp.pad(xt, ((0, 0), (0, 0), (0, n_pad - N)))

    kernel = _make_fused_kernel(nbk, H, F, nc, widths)

    in_specs = [pl.BlockSpec((H, W0, nb), lambda i: (0, 0, i))]
    for w in prep["w_list"]:
        r, c = w.shape
        in_specs.append(pl.BlockSpec((r, c), lambda i: (0, 0)))
    for b in prep["b_list"]:
        r, c = b.shape
        in_specs.append(pl.BlockSpec((r, c), lambda i: (0, 0)))
    in_specs.append(pl.BlockSpec(prep["wlin"].shape, lambda i: (0, 0, 0)))
    in_specs.append(pl.BlockSpec(prep["blin"].shape, lambda i: (0, 0)))

    out_specs = [pl.BlockSpec((nc, nb), lambda i: (0, i))]
    out_shape = [jax.ShapeDtypeStruct((nc, n_pad), jnp.float32)]
    for _ in range(nbk):
        out_specs.append(pl.BlockSpec((H, F, nb), lambda i: (0, 0, i)))
        out_shape.append(jax.ShapeDtypeStruct((H, F, n_pad), jnp.float32))

    outs = pl.pallas_call(
        kernel,
        grid=(n_pad // nb,),
        in_specs=in_specs,
        out_specs=out_specs,
        out_shape=out_shape,
        compiler_params=pltpu.CompilerParams(dimension_semantics=("parallel",)),
    )(xt, *prep["w_list"], *prep["b_list"], prep["wlin"], prep["blin"])

    logits = outs[0][:, :N].T                                          # (N, nc)
    features_calculated = {
        "layer_" + str(i): jnp.transpose(outs[1 + i][:, :, :N], (2, 1, 0))  # (N, F, H)
        for i in range(nbk)
    }
    # TODO(synk): lambda_value / gradient-reversal domain head not exercised (lambda_value=None path).
    return logits, features_calculated


# ---------------------------------------------------------------------------
# Independent plain-JAX reference + parameter init
# ---------------------------------------------------------------------------
def _reference_forward(x, params):
    """Independent reference.  MXU operands are cast to bf16 (matching the kernel's deliberate
    bf16-operand / f32-accumulate policy) so the comparison tolerance can be tight."""
    hi = jax.lax.Precision.HIGHEST
    a = x.astype(jnp.float32)
    feats = {}
    for i, blk in enumerate(params["blocks"]):
        w = blk["w"]                                     # (Cout, Cin, 1, Kw)
        cout, cin, _, kwb = w.shape
        scale = blk["gamma"] / jnp.sqrt(blk["var"] + 1e-3)       # eps = 0.001 per module spec
        wfold = (w[:, :, 0, :] * scale[:, None, None]).astype(jnp.bfloat16)
        bias = (blk["b"] - blk["mean"]) * scale + blk["beta"]
        N, _, H, W = a.shape
        wout = W - kwb + 1
        z = jnp.zeros((N, cout, H, wout), jnp.float32) + bias[None, :, None, None]
        ab = a.astype(jnp.bfloat16)
        for k in range(kwb):
            z = z + jnp.einsum("nchw,oc->nohw", ab[:, :, :, k:k + wout], wfold[:, :, k],
                               precision=hi, preferred_element_type=jnp.float32)
        z = jnp.where(z > 0.0, z, 0.1 * z)
        feats["layer_" + str(i)] = jnp.mean(z, axis=3)
        a = z
    flat = a.reshape(a.shape[0], -1)
    out = jnp.dot(flat.astype(jnp.bfloat16), params["w_out"].T.astype(jnp.bfloat16),
                  precision=hi, preferred_element_type=jnp.float32) + params["b_out"][None, :]
    return out, feats


def init_params(key, number_of_class, number_of_blocks, number_of_channels,
                number_of_features_output, kw):
    blocks = []
    F = number_of_features_output
    for i in range(number_of_blocks):
        cin = 1 if i == 0 else F
        key, k1, k2, k3, k4, k5, k6 = jax.random.split(key, 7)
        blocks.append(dict(
            w=0.1 * jax.random.normal(k1, (F, cin, 1, kw), jnp.float32),
            b=0.05 * jax.random.normal(k2, (F,), jnp.float32),
            gamma=1.0 + 0.1 * jax.random.normal(k3, (F,), jnp.float32),
            beta=0.05 * jax.random.normal(k4, (F,), jnp.float32),
            mean=0.05 * jax.random.normal(k5, (F,), jnp.float32),
            var=0.9 + 0.1 * jnp.abs(jax.random.normal(k6, (F,), jnp.float32)),
        ))
    key, k7, k8 = jax.random.split(key, 3)
    in_feat = number_of_channels * F * 5                 # _size_feature_maps[-1] == 5
    return dict(
        blocks=blocks,
        w_out=0.05 * jax.random.normal(k7, (number_of_class, in_feat), jnp.float32),
        b_out=0.05 * jax.random.normal(k8, (number_of_class,), jnp.float32),
    )


if __name__ == "__main__":
    # 2 blocks, filter (1, 4), 4 EMG channels (H), 8 feature maps, width 11 -> 8 -> 5
    # so the final flatten is C*F*5 as in the module.  batch = 256 gives 2 batch tiles
    # of 128 -> 2 parallel grid steps (keeps both v7x TensorCores busy).
    number_of_class = 3
    number_of_blocks = 2
    number_of_channels = 4   # H (EMG channels)
    number_of_features = 8   # F
    kw = 4
    batch = 256
    width = 5 + (kw - 1) * number_of_blocks  # 11

    key = jax.random.PRNGKey(0)
    kx, kp = jax.random.split(key)
    x = jax.random.normal(kx, (batch, 1, number_of_channels, width), jnp.float32)
    params = init_params(kp, number_of_class, number_of_blocks,
                         number_of_channels, number_of_features, kw)
    prep = prepare_params(params, number_of_channels, width)

    fwd = jax.jit(lambda xx: model_forward(xx, prep))
    output, features_calculated = fwd(x)
    jax.block_until_ready(output)
    for v in features_calculated.values():
        jax.block_until_ready(v)

    assert output.shape == (batch, number_of_class)
    assert features_calculated["layer_0"].shape == (batch, number_of_features, number_of_channels)

    # Numerical check.  Both kernel and reference use bf16 MXU operands with f32 accumulation,
    # so 1e-2 is a tight bound here; a wrong weight permutation / packing bug would be off by
    # O(0.1 - 1), far above this tolerance.
    ref_out, ref_feats = _reference_forward(x, params)
    assert bool(jnp.allclose(output, ref_out, rtol=1e-2, atol=1e-2)), \
        float(jnp.max(jnp.abs(output - ref_out)))
    for i in range(number_of_blocks):
        fk = features_calculated["layer_" + str(i)]
        fr = ref_feats["layer_" + str(i)]
        assert bool(jnp.allclose(fk, fr, rtol=1e-2, atol=1e-2)), \
            float(jnp.max(jnp.abs(fk - fr)))

    print("KERNEL_OK")
</pallas_src>

<mosaic_0001>
module attributes {stable_mosaic.version = 11 : i64} {
  func.func @kernel(%arg0: i32, %arg1: memref<4x11x128xf32, #tpu.memory_space<vmem>>, %arg2: memref<64x11xbf16, #tpu.memory_space<vmem>>, %arg3: memref<40x64xbf16, #tpu.memory_space<vmem>>, %arg4: memref<64x1xf32, #tpu.memory_space<vmem>>, %arg5: memref<40x1xf32, #tpu.memory_space<vmem>>, %arg6: memref<4x3x40xbf16, #tpu.memory_space<vmem>>, %arg7: memref<3x1xf32, #tpu.memory_space<vmem>>, %arg8: memref<3x128xf32, #tpu.memory_space<vmem>>, %arg9: memref<4x8x128xf32, #tpu.memory_space<vmem>>, %arg10: memref<4x8x128xf32, #tpu.memory_space<vmem>>) attributes {dimension_semantics = [#tpu.dimension_semantics<parallel>], iteration_bounds = array<i64: 2>, scalar_prefetch = 0 : i64, scratch_operands = 0 : i64, tpu.core_type = #tpu.core_type<tc>, window_params = [{transform_indices = @transform_0, window_bounds = array<i64: 4, 11, 128>}, {pipeline_mode = #tpu.pipeline_mode<synchronous>, transform_indices = @transform_1, window_bounds = array<i64: 64, 11>}, {pipeline_mode = #tpu.pipeline_mode<synchronous>, transform_indices = @transform_2, window_bounds = array<i64: 40, 64>}, {pipeline_mode = #tpu.pipeline_mode<synchronous>, transform_indices = @transform_3, window_bounds = array<i64: 64, 1>}, {pipeline_mode = #tpu.pipeline_mode<synchronous>, transform_indices = @transform_4, window_bounds = array<i64: 40, 1>}, {pipeline_mode = #tpu.pipeline_mode<synchronous>, transform_indices = @transform_5, window_bounds = array<i64: 4, 3, 40>}, {pipeline_mode = #tpu.pipeline_mode<synchronous>, transform_indices = @transform_6, window_bounds = array<i64: 3, 1>}, {transform_indices = @transform_7, window_bounds = array<i64: 3, 128>}, {transform_indices = @transform_8, window_bounds = array<i64: 4, 8, 128>}, {transform_indices = @transform_9, window_bounds = array<i64: 4, 8, 128>}]} {
    %c0 = arith.constant 0 : index
    %c0_0 = arith.constant 0 : index
    %0 = vector.load %arg2[%c0, %c0_0] : memref<64x11xbf16, #tpu.memory_space<vmem>>, vector<64x11xbf16>
    %c0_1 = arith.constant 0 : index
    %c0_2 = arith.constant 0 : index
    %1 = vector.load %arg3[%c0_1, %c0_2] : memref<40x64xbf16, #tpu.memory_space<vmem>>, vector<40x64xbf16>
    %c0_3 = arith.constant 0 : index
    %c0_4 = arith.constant 0 : index
    %2 = vector.load %arg4[%c0_3, %c0_4] : memref<64x1xf32, #tpu.memory_space<vmem>>, vector<64x1xf32>
    %3 = vector.shape_cast %2 : vector<64x1xf32> to vector<64x1xf32>
    %4 = vector.broadcast %3 : vector<64x1xf32> to vector<64x128xf32>
    %c0_5 = arith.constant 0 : index
    %c0_6 = arith.constant 0 : index
    %5 = vector.load %arg5[%c0_5, %c0_6] : memref<40x1xf32, #tpu.memory_space<vmem>>, vector<40x1xf32>
    %6 = vector.shape_cast %5 : vector<40x1xf32> to vector<40x1xf32>
    %7 = vector.broadcast %6 : vector<40x1xf32> to vector<40x128xf32>
    %c0_7 = arith.constant 0 : index
    %c0_8 = arith.constant 0 : index
    %c0_9 = arith.constant 0 : index
    %8 = vector.load %arg6[%c0_7, %c0_8, %c0_9] : memref<4x3x40xbf16, #tpu.memory_space<vmem>>, vector<4x3x40xbf16>
    %c0_10 = arith.constant 0 : index
    %c0_11 = arith.constant 0 : index
    %9 = vector.load %arg7[%c0_10, %c0_11] : memref<3x1xf32, #tpu.memory_space<vmem>>, vector<3x1xf32>
    %10 = vector.shape_cast %9 : vector<3x1xf32> to vector<3x1xf32>
    %11 = vector.broadcast %10 : vector<3x1xf32> to vector<3x128xf32>
    %c0_12 = arith.constant 0 : index
    %c0_13 = arith.constant 0 : index
    %c0_14 = arith.constant 0 : index
    %12 = vector.load %arg1[%c0_12, %c0_13, %c0_14] : memref<4x11x128xf32, #tpu.memory_space<vmem>>, vector<1x11x128xf32>
    %13 = vector.shape_cast %12 : vector<1x11x128xf32> to vector<11x128xf32>
    %14 = arith.truncf %13 : vector<11x128xf32> to vector<11x128xbf16>
    %cst = arith.constant dense<0.000000e+00> : vector<64x128xf32>
    %15 = tpu.matmul %0, %14, %cst {dimension_numbers = #tpu.dot_dimension_numbers<[1], [0], [0], [1], [0, 0, 1, 1], [], []>} : vector<64x11xbf16>, vector<11x128xbf16>, vector<64x128xf32> -> vector<64x128xf32>
    %16 = arith.addf %15, %4 : vector<64x128xf32>
    %cst_15 = arith.constant 0.000000e+00 : f32
    %17 = vector.broadcast %cst_15 : f32 to vector<64x128xf32>
    %18 = arith.cmpf ogt, %16, %17 : vector<64x128xf32>
    %cst_16 = arith.constant 1.000000e-01 : f32
    %19 = vector.broadcast %cst_16 : f32 to vector<64x128xf32>
    %20 = arith.mulf %19, %16 : vector<64x128xf32>
    %21 = arith.select %18, %16, %20 : vector<64x128xi1>, vector<64x128xf32>
    %22 = vector.extract_strided_slice %21 {offsets = [0, 0], sizes = [8, 128], strides = [1, 1]} : vector<64x128xf32> to vector<8x128xf32>
    %23 = vector.extract_strided_slice %21 {offsets = [8, 0], sizes = [8, 128], strides = [1, 1]} : vector<64x128xf32> to vector<8x128xf32>
    %24 = arith.addf %22, %23 : vector<8x128xf32>
    %25 = vector.extract_strided_slice %21 {offsets = [16, 0], sizes = [8, 128], strides = [1, 1]} : vector<64x128xf32> to vector<8x128xf32>
    %26 = arith.addf %24, %25 : vector<8x128xf32>
    %27 = vector.extract_strided_slice %21 {offsets = [24, 0], sizes = [8, 128], strides = [1, 1]} : vector<64x128xf32> to vector<8x128xf32>
    %28 = arith.addf %26, %27 : vector<8x128xf32>
    %29 = vector.extract_strided_slice %21 {offsets = [32, 0], sizes = [8, 128], strides = [1, 1]} : vector<64x128xf32> to vector<8x128xf32>
    %30 = arith.addf %28, %29 : vector<8x128xf32>
    %31 = vector.extract_strided_slice %21 {offsets = [40, 0], sizes = [8, 128], strides = [1, 1]} : vector<64x128xf32> to vector<8x128xf32>
    %32 = arith.addf %30, %31 : vector<8x128xf32>
    %33 = vector.extract_strided_slice %21 {offsets = [48, 0], sizes = [8, 128], strides = [1, 1]} : vector<64x128xf32> to vector<8x128xf32>
    %34 = arith.addf %32, %33 : vector<8x128xf32>
    %35 = vector.extract_strided_slice %21 {offsets = [56, 0], sizes = [8, 128], strides = [1, 1]} : vector<64x128xf32> to vector<8x128xf32>
    %36 = arith.addf %34, %35 : vector<8x128xf32>
    %cst_17 = arith.constant 1.250000e-01 : f32
    %37 = vector.broadcast %cst_17 : f32 to vector<8x128xf32>
    %38 = arith.mulf %36, %37 : vector<8x128xf32>
    %c0_18 = arith.constant 0 : index
    %c0_19 = arith.constant 0 : index
    %c0_20 = arith.constant 0 : index
    %39 = vector.load %arg9[%c0_18, %c0_19, %c0_20] : memref<4x8x128xf32, #tpu.memory_space<vmem>>, vector<1x8x128xf32>
    %40 = vector.shape_cast %39 : vector<1x8x128xf32> to vector<8x128xf32>
    %41 = vector.shape_cast %38 : vector<8x128xf32> to vector<1x8x128xf32>
    tpu.vector_store %arg9[%c0_18, %c0_19, %c0_20], %41 {strides = array<i32>} : memref<4x8x128xf32, #tpu.memory_space<vmem>>, vector<1x8x128xf32>,
    %42 = arith.truncf %21 : vector<64x128xf32> to vector<64x128xbf16>
    %cst_21 = arith.constant dense<0.000000e+00> : vector<40x128xf32>
    %43 = tpu.matmul %1, %42, %cst_21 {dimension_numbers = #tpu.dot_dimension_numbers<[1], [0], [0], [1], [0, 0, 1, 1], [], []>} : vector<40x64xbf16>, vector<64x128xbf16>, vector<40x128xf32> -> vector<40x128xf32>
    %44 = arith.addf %43, %7 : vector<40x128xf32>
    %cst_22 = arith.constant 0.000000e+00 : f32
    %45 = vector.broadcast %cst_22 : f32 to vector<40x128xf32>
    %46 = arith.cmpf ogt, %44, %45 : vector<40x128xf32>
    %cst_23 = arith.constant 1.000000e-01 : f32
    %47 = vector.broadcast %cst_23 : f32 to vector<40x128xf32>
    %48 = arith.mulf %47, %44 : vector<40x128xf32>
    %49 = arith.select %46, %44, %48 : vector<40x128xi1>, vector<40x128xf32>
    %50 = vector.extract_strided_slice %49 {offsets = [0, 0], sizes = [8, 128], strides = [1, 1]} : vector<40x128xf32> to vector<8x128xf32>
    %51 = vector.extract_strided_slice %49 {offsets = [8, 0], sizes = [8, 128], strides = [1, 1]} : vector<40x128xf32> to vector<8x128xf32>
    %52 = arith.addf %50, %51 : vector<8x128xf32>
    %53 = vector.extract_strided_slice %49 {offsets = [16, 0], sizes = [8, 128], strides = [1, 1]} : vector<40x128xf32> to vector<8x128xf32>
    %54 = arith.addf %52, %53 : vector<8x128xf32>
    %55 = vector.extract_strided_slice %49 {offsets = [24, 0], sizes = [8, 128], strides = [1, 1]} : vector<40x128xf32> to vector<8x128xf32>
    %56 = arith.addf %54, %55 : vector<8x128xf32>
    %57 = vector.extract_strided_slice %49 {offsets = [32, 0], sizes = [8, 128], strides = [1, 1]} : vector<40x128xf32> to vector<8x128xf32>
    %58 = arith.addf %56, %57 : vector<8x128xf32>
    %cst_24 = arith.constant 2.000000e-01 : f32
    %59 = vector.broadcast %cst_24 : f32 to vector<8x128xf32>
    %60 = arith.mulf %58, %59 : vector<8x128xf32>
    %c0_25 = arith.constant 0 : index
    %c0_26 = arith.constant 0 : index
    %c0_27 = arith.constant 0 : index
    %61 = vector.load %arg10[%c0_25, %c0_26, %c0_27] : memref<4x8x128xf32, #tpu.memory_space<vmem>>, vector<1x8x128xf32>
    %62 = vector.shape_cast %61 : vector<1x8x128xf32> to vector<8x128xf32>
    %63 = vector.shape_cast %60 : vector<8x128xf32> to vector<1x8x128xf32>
    tpu.vector_store %arg10[%c0_25, %c0_26, %c0_27], %63 {strides = array<i32>} : memref<4x8x128xf32, #tpu.memory_space<vmem>>, vector<1x8x128xf32>,
    %64 = vector.extract_strided_slice %8 {offsets = [0, 0, 0], sizes = [1, 3, 40], strides = [1, 1, 1]} : vector<4x3x40xbf16> to vector<1x3x40xbf16>
    %65 = vector.shape_cast %64 : vector<1x3x40xbf16> to vector<3x40xbf16>
    %66 = arith.truncf %49 : vector<40x128xf32> to vector<40x128xbf16>
    %cst_28 = arith.constant dense<0.000000e+00> : vector<3x128xf32>
    %67 = tpu.matmul %65, %66, %cst_28 {dimension_numbers = #tpu.dot_dimension_numbers<[1], [0], [0], [1], [0, 0, 1, 1], [], []>} : vector<3x40xbf16>, vector<40x128xbf16>, vector<3x128xf32> -> vector<3x128xf32>
    %68 = arith.addf %11, %67 : vector<3x128xf32>
    %c1 = arith.constant 1 : index
    %c0_29 = arith.constant 0 : index
    %c0_30 = arith.constant 0 : index
    %69 = vector.load %arg1[%c1, %c0_29, %c0_30] : memref<4x11x128xf32, #tpu.memory_space<vmem>>, vector<1x11x128xf32>
    %70 = vector.shape_cast %69 : vector<1x11x128xf32> to vector<11x128xf32>
    %71 = arith.truncf %70 : vector<11x128xf32> to vector<11x128xbf16>
    %cst_31 = arith.constant dense<0.000000e+00> : vector<64x128xf32>
    %72 = tpu.matmul %0, %71, %cst_31 {dimension_numbers = #tpu.dot_dimension_numbers<[1], [0], [0], [1], [0, 0, 1, 1], [], []>} : vector<64x11xbf16>, vector<11x128xbf16>, vector<64x128xf32> -> vector<64x128xf32>
    %73 = arith.addf %72, %4 : vector<64x128xf32>
    %cst_32 = arith.constant 0.000000e+00 : f32
    %74 = vector.broadcast %cst_32 : f32 to vector<64x128xf32>
    %75 = arith.cmpf ogt, %73, %74 : vector<64x128xf32>
    %cst_33 = arith.constant 1.000000e-01 : f32
    %76 = vector.broadcast %cst_33 : f32 to vector<64x128xf32>
    %77 = arith.mulf %76, %73 : vector<64x128xf32>
    %78 = arith.select %75, %73, %77 : vector<64x128xi1>, vector<64x128xf32>
    %79 = vector.extract_strided_slice %78 {offsets = [0, 0], sizes = [8, 128], strides = [1, 1]} : vector<64x128xf32> to vector<8x128xf32>
    %80 = vector.extract_strided_slice %78 {offsets = [8, 0], sizes = [8, 128], strides = [1, 1]} : vector<64x128xf32> to vector<8x128xf32>
    %81 = arith.addf %79, %80 : vector<8x128xf32>
    %82 = vector.extract_strided_slice %78 {offsets = [16, 0], sizes = [8, 128], strides = [1, 1]} : vector<64x128xf32> to vector<8x128xf32>
    %83 = arith.addf %81, %82 : vector<8x128xf32>
    %84 = vector.extract_strided_slice %78 {offsets = [24, 0], sizes = [8, 128], strides = [1, 1]} : vector<64x128xf32> to vector<8x128xf32>
    %85 = arith.addf %83, %84 : vector<8x128xf32>
    %86 = vector.extract_strided_slice %78 {offsets = [32, 0], sizes = [8, 128], strides = [1, 1]} : vector<64x128xf32> to vector<8x128xf32>
    %87 = arith.addf %85, %86 : vector<8x128xf32>
    %88 = vector.extract_strided_slice %78 {offsets = [40, 0], sizes = [8, 128], strides = [1, 1]} : vector<64x128xf32> to vector<8x128xf32>
    %89 = arith.addf %87, %88 : vector<8x128xf32>
    %90 = vector.extract_strided_slice %78 {offsets = [48, 0], sizes = [8, 128], strides = [1, 1]} : vector<64x128xf32> to vector<8x128xf32>
    %91 = arith.addf %89, %90 : vector<8x128xf32>
    %92 = vector.extract_strided_slice %78 {offsets = [56, 0], sizes = [8, 128], strides = [1, 1]} : vector<64x128xf32> to vector<8x128xf32>
    %93 = arith.addf %91, %92 : vector<8x128xf32>
    %cst_34 = arith.constant 1.250000e-01 : f32
    %94 = vector.broadcast %cst_34 : f32 to vector<8x128xf32>
    %95 = arith.mulf %93, %94 : vector<8x128xf32>
    %c1_35 = arith.constant 1 : index
    %c0_36 = arith.constant 0 : index
    %c0_37 = arith.constant 0 : index
    %96 = vector.load %arg9[%c1_35, %c0_36, %c0_37] : memref<4x8x128xf32, #tpu.memory_space<vmem>>, vector<1x8x128xf32>
    %97 = vector.shape_cast %96 : vector<1x8x128xf32> to vector<8x128xf32>
    %98 = vector.shape_cast %95 : vector<8x128xf32> to vector<1x8x128xf32>
    tpu.vector_store %arg9[%c1_35, %c0_36, %c0_37], %98 {strides = array<i32>} : memref<4x8x128xf32, #tpu.memory_space<vmem>>, vector<1x8x128xf32>,
    %99 = arith.truncf %78 : vector<64x128xf32> to vector<64x128xbf16>
    %cst_38 = arith.constant dense<0.000000e+00> : vector<40x128xf32>
    %100 = tpu.matmul %1, %99, %cst_38 {dimension_numbers = #tpu.dot_dimension_numbers<[1], [0], [0], [1], [0, 0, 1, 1], [], []>} : vector<40x64xbf16>, vector<64x128xbf16>, vector<40x128xf32> -> vector<40x128xf32>
    %101 = arith.addf %100, %7 : vector<40x128xf32>
    %cst_39 = arith.constant 0.000000e+00 : f32
    %102 = vector.broadcast %cst_39 : f32 to vector<40x128xf32>
    %103 = arith.cmpf ogt, %101, %102 : vector<40x128xf32>
    %cst_40 = arith.constant 1.000000e-01 : f32
    %104 = vector.broadcast %cst_40 : f32 to vector<40x128xf32>
    %105 = arith.mulf %104, %101 : vector<40x128xf32>
    %106 = arith.select %103, %101, %105 : vector<40x128xi1>, vector<40x128xf32>
    %107 = vector.extract_strided_slice %106 {offsets = [0, 0], sizes = [8, 128], strides = [1, 1]} : vector<40x128xf32> to vector<8x128xf32>
    %108 = vector.extract_strided_slice %106 {offsets = [8, 0], sizes = [8, 128], strides = [1, 1]} : vector<40x128xf32> to vector<8x128xf32>
    %109 = arith.addf %107, %108 : vector<8x128xf32>
    %110 = vector.extract_strided_slice %106 {offsets = [16, 0], sizes = [8, 128], strides = [1, 1]} : vector<40x128xf32> to vector<8x128xf32>
    %111 = arith.addf %109, %110 : vector<8x128xf32>
    %112 = vector.extract_strided_slice %106 {offsets = [24, 0], sizes = [8, 128], strides = [1, 1]} : vector<40x128xf32> to vector<8x128xf32>
    %113 = arith.addf %111, %112 : vector<8x128xf32>
    %114 = vector.extract_strided_slice %106 {offsets = [32, 0], sizes = [8, 128], strides = [1, 1]} : vector<40x128xf32> to vector<8x128xf32>
    %115 = arith.addf %113, %114 : vector<8x128xf32>
    %cst_41 = arith.constant 2.000000e-01 : f32
    %116 = vector.broadcast %cst_41 : f32 to vector<8x128xf32>
    %117 = arith.mulf %115, %116 : vector<8x128xf32>
    %c1_42 = arith.constant 1 : index
    %c0_43 = arith.constant 0 : index
    %c0_44 = arith.constant 0 : index
    %118 = vector.load %arg10[%c1_42, %c0_43, %c0_44] : memref<4x8x128xf32, #tpu.memory_space<vmem>>, vector<1x8x128xf32>
    %119 = vector.shape_cast %118 : vector<1x8x128xf32> to vector<8x128xf32>
    %120 = vector.shape_cast %117 : vector<8x128xf32> to vector<1x8x128xf32>
    tpu.vector_store %arg10[%c1_42, %c0_43, %c0_44], %120 {strides = array<i32>} : memref<4x8x128xf32, #tpu.memory_space<vmem>>, vector<1x8x128xf32>,
    %121 = vector.extract_strided_slice %8 {offsets = [1, 0, 0], sizes = [1, 3, 40], strides = [1, 1, 1]} : vector<4x3x40xbf16> to vector<1x3x40xbf16>
    %122 = vector.shape_cast %121 : vector<1x3x40xbf16> to vector<3x40xbf16>
    %123 = arith.truncf %106 : vector<40x128xf32> to vector<40x128xbf16>
    %cst_45 = arith.constant dense<0.000000e+00> : vector<3x128xf32>
    %124 = tpu.matmul %122, %123, %cst_45 {dimension_numbers = #tpu.dot_dimension_numbers<[1], [0], [0], [1], [0, 0, 1, 1], [], []>} : vector<3x40xbf16>, vector<40x128xbf16>, vector<3x128xf32> -> vector<3x128xf32>
    %125 = arith.addf %68, %124 : vector<3x128xf32>
    %c2 = arith.constant 2 : index
    %c0_46 = arith.constant 0 : index
    %c0_47 = arith.constant 0 : index
    %126 = vector.load %arg1[%c2, %c0_46, %c0_47] : memref<4x11x128xf32, #tpu.memory_space<vmem>>, vector<1x11x128xf32>
    %127 = vector.shape_cast %126 : vector<1x11x128xf32> to vector<11x128xf32>
    %128 = arith.truncf %127 : vector<11x128xf32> to vector<11x128xbf16>
    %cst_48 = arith.constant dense<0.000000e+00> : vector<64x128xf32>
    %129 = tpu.matmul %0, %128, %cst_48 {dimension_numbers = #tpu.dot_dimension_numbers<[1], [0], [0], [1], [0, 0, 1, 1], [], []>} : vector<64x11xbf16>, vector<11x128xbf16>, vector<64x128xf32> -> vector<64x128xf32>
    %130 = arith.addf %129, %4 : vector<64x128xf32>
    %cst_49 = arith.constant 0.000000e+00 : f32
    %131 = vector.broadcast %cst_49 : f32 to vector<64x128xf32>
    %132 = arith.cmpf ogt, %130, %131 : vector<64x128xf32>
    %cst_50 = arith.constant 1.000000e-01 : f32
    %133 = vector.broadcast %cst_50 : f32 to vector<64x128xf32>
    %134 = arith.mulf %133, %130 : vector<64x128xf32>
    %135 = arith.select %132, %130, %134 : vector<64x128xi1>, vector<64x128xf32>
    %136 = vector.extract_strided_slice %135 {offsets = [0, 0], sizes = [8, 128], strides = [1, 1]} : vector<64x128xf32> to vector<8x128xf32>
    %137 = vector.extract_strided_slice %135 {offsets = [8, 0], sizes = [8, 128], strides = [1, 1]} : vector<64x128xf32> to vector<8x128xf32>
    %138 = arith.addf %136, %137 : vector<8x128xf32>
    %139 = vector.extract_strided_slice %135 {offsets = [16, 0], sizes = [8, 128], strides = [1, 1]} : vector<64x128xf32> to vector<8x128xf32>
    %140 = arith.addf %138, %139 : vector<8x128xf32>
    %141 = vector.extract_strided_slice %135 {offsets = [24, 0], sizes = [8, 128], strides = [1, 1]} : vector<64x128xf32> to vector<8x128xf32>
    %142 = arith.addf %140, %141 : vector<8x128xf32>
    %143 = vector.extract_strided_slice %135 {offsets = [32, 0], sizes = [8, 128], strides = [1, 1]} : vector<64x128xf32> to vector<8x128xf32>
    %144 = arith.addf %142, %143 : vector<8x128xf32>
    %145 = vector.extract_strided_slice %135 {offsets = [40, 0], sizes = [8, 128], strides = [1, 1]} : vector<64x128xf32> to vector<8x128xf32>
    %146 = arith.addf %144, %145 : vector<8x128xf32>
    %147 = vector.extract_strided_slice %135 {offsets = [48, 0], sizes = [8, 128], strides = [1, 1]} : vector<64x128xf32> to vector<8x128xf32>
    %148 = arith.addf %146, %147 : vector<8x128xf32>
    %149 = vector.extract_strided_slice %135 {offsets = [56, 0], sizes = [8, 128], strides = [1, 1]} : vector<64x128xf32> to vector<8x128xf32>
    %150 = arith.addf %148, %149 : vector<8x128xf32>
    %cst_51 = arith.constant 1.250000e-01 : f32
    %151 = vector.broadcast %cst_51 : f32 to vector<8x128xf32>
    %152 = arith.mulf %150, %151 : vector<8x128xf32>
    %c2_52 = arith.constant 2 : index
    %c0_53 = arith.constant 0 : index
    %c0_54 = arith.constant 0 : index
    %153 = vector.load %arg9[%c2_52, %c0_53, %c0_54] : memref<4x8x128xf32, #tpu.memory_space<vmem>>, vector<1x8x128xf32>
    %154 = vector.shape_cast %153 : vector<1x8x128xf32> to vector<8x128xf32>
    %155 = vector.shape_cast %152 : vector<8x128xf32> to vector<1x8x128xf32>
    tpu.vector_store %arg9[%c2_52, %c0_53, %c0_54], %155 {strides = array<i32>} : memref<4x8x128xf32, #tpu.memory_space<vmem>>, vector<1x8x128xf32>,
    %156 = arith.truncf %135 : vector<64x128xf32> to vector<64x128xbf16>
    %cst_55 = arith.constant dense<0.000000e+00> : vector<40x128xf32>
    %157 = tpu.matmul %1, %156, %cst_55 {dimension_numbers = #tpu.dot_dimension_numbers<[1], [0], [0], [1], [0, 0, 1, 1], [], []>} : vector<40x64xbf16>, vector<64x128xbf16>, vector<40x128xf32> -> vector<40x128xf32>
    %158 = arith.addf %157, %7 : vector<40x128xf32>
    %cst_56 = arith.constant 0.000000e+00 : f32
    %159 = vector.broadcast %cst_56 : f32 to vector<40x128xf32>
    %160 = arith.cmpf ogt, %158, %159 : vector<40x128xf32>
    %cst_57 = arith.constant 1.000000e-01 : f32
    %161 = vector.broadcast %cst_57 : f32 to vector<40x128xf32>
    %162 = arith.mulf %161, %158 : vector<40x128xf32>
    %163 = arith.select %160, %158, %162 : vector<40x128xi1>, vector<40x128xf32>
    %164 = vector.extract_strided_slice %163 {offsets = [0, 0], sizes = [8, 128], strides = [1, 1]} : vector<40x128xf32> to vector<8x128xf32>
    %165 = vector.extract_strided_slice %163 {offsets = [8, 0], sizes = [8, 128], strides = [1, 1]} : vector<40x128xf32> to vector<8x128xf32>
    %166 = arith.addf %164, %165 : vector<8x128xf32>
    %167 = vector.extract_strided_slice %163 {offsets = [16, 0], sizes = [8, 128], strides = [1, 1]} : vector<40x128xf32> to vector<8x128xf32>
    %168 = arith.addf %166, %167 : vector<8x128xf32>
    %169 = vector.extract_strided_slice %163 {offsets = [24, 0], sizes = [8, 128], strides = [1, 1]} : vector<40x128xf32> to vector<8x128xf32>
    %170 = arith.addf %168, %169 : vector<8x128xf32>
    %171 = vector.extract_strided_slice %163 {offsets = [32, 0], sizes = [8, 128], strides = [1, 1]} : vector<40x128xf32> to vector<8x128xf32>
    %172 = arith.addf %170, %171 : vector<8x128xf32>
    %cst_58 = arith.constant 2.000000e-01 : f32
    %173 = vector.broadcast %cst_58 : f32 to vector<8x128xf32>
    %174 = arith.mulf %172, %173 : vector<8x128xf32>
    %c2_59 = arith.constant 2 : index
    %c0_60 = arith.constant 0 : index
    %c0_61 = arith.constant 0 : index
    %175 = vector.load %arg10[%c2_59, %c0_60, %c0_61] : memref<4x8x128xf32, #tpu.memory_space<vmem>>, vector<1x8x128xf32>
    %176 = vector.shape_cast %175 : vector<1x8x128xf32> to vector<8x128xf32>
    %177 = vector.shape_cast %174 : vector<8x128xf32> to vector<1x8x128xf32>
    tpu.vector_store %arg10[%c2_59, %c0_60, %c0_61], %177 {strides = array<i32>} : memref<4x8x128xf32, #tpu.memory_space<vmem>>, vector<1x8x128xf32>,
    %178 = vector.extract_strided_slice %8 {offsets = [2, 0, 0], sizes = [1, 3, 40], strides = [1, 1, 1]} : vector<4x3x40xbf16> to vector<1x3x40xbf16>
    %179 = vector.shape_cast %178 : vector<1x3x40xbf16> to vector<3x40xbf16>
    %180 = arith.truncf %163 : vector<40x128xf32> to vector<40x128xbf16>
    %cst_62 = arith.constant dense<0.000000e+00> : vector<3x128xf32>
    %181 = tpu.matmul %179, %180, %cst_62 {dimension_numbers = #tpu.dot_dimension_numbers<[1], [0], [0], [1], [0, 0, 1, 1], [], []>} : vector<3x40xbf16>, vector<40x128xbf16>, vector<3x128xf32> -> vector<3x128xf32>
    %182 = arith.addf %125, %181 : vector<3x128xf32>
    %c3 = arith.constant 3 : index
    %c0_63 = arith.constant 0 : index
    %c0_64 = arith.constant 0 : index
    %183 = vector.load %arg1[%c3, %c0_63, %c0_64] : memref<4x11x128xf32, #tpu.memory_space<vmem>>, vector<1x11x128xf32>
    %184 = vector.shape_cast %183 : vector<1x11x128xf32> to vector<11x128xf32>
    %185 = arith.truncf %184 : vector<11x128xf32> to vector<11x128xbf16>
    %cst_65 = arith.constant dense<0.000000e+00> : vector<64x128xf32>
    %186 = tpu.matmul %0, %185, %cst_65 {dimension_numbers = #tpu.dot_dimension_numbers<[1], [0], [0], [1], [0, 0, 1, 1], [], []>} : vector<64x11xbf16>, vector<11x128xbf16>, vector<64x128xf32> -> vector<64x128xf32>
    %187 = arith.addf %186, %4 : vector<64x128xf32>
    %cst_66 = arith.constant 0.000000e+00 : f32
    %188 = vector.broadcast %cst_66 : f32 to vector<64x128xf32>
    %189 = arith.cmpf ogt, %187, %188 : vector<64x128xf32>
    %cst_67 = arith.constant 1.000000e-01 : f32
    %190 = vector.broadcast %cst_67 : f32 to vector<64x128xf32>
    %191 = arith.mulf %190, %187 : vector<64x128xf32>
    %192 = arith.select %189, %187, %191 : vector<64x128xi1>, vector<64x128xf32>
    %193 = vector.extract_strided_slice %192 {offsets = [0, 0], sizes = [8, 128], strides = [1, 1]} : vector<64x128xf32> to vector<8x128xf32>
    %194 = vector.extract_strided_slice %192 {offsets = [8, 0], sizes = [8, 128], strides = [1, 1]} : vector<64x128xf32> to vector<8x128xf32>
    %195 = arith.addf %193, %194 : vector<8x128xf32>
    %196 = vector.extract_strided_slice %192 {offsets = [16, 0], sizes = [8, 128], strides = [1, 1]} : vector<64x128xf32> to vector<8x128xf32>
    %197 = arith.addf %195, %196 : vector<8x128xf32>
    %198 = vector.extract_strided_slice %192 {offsets = [24, 0], sizes = [8, 128], strides = [1, 1]} : vector<64x128xf32> to vector<8x128xf32>
    %199 = arith.addf %197, %198 : vector<8x128xf32>
    %200 = vector.extract_strided_slice %192 {offsets = [32, 0], sizes = [8, 128], strides = [1, 1]} : vector<64x128xf32> to vector<8x128xf32>
    %201 = arith.addf %199, %200 : vector<8x128xf32>
    %202 = vector.extract_strided_slice %192 {offsets = [40, 0], sizes = [8, 128], strides = [1, 1]} : vector<64x128xf32> to vector<8x128xf32>
    %203 = arith.addf %201, %202 : vector<8x128xf32>
    %204 = vector.extract_strided_slice %192 {offsets = [48, 0], sizes = [8, 128], strides = [1, 1]} : vector<64x128xf32> to vector<8x128xf32>
    %205 = arith.addf %203, %204 : vector<8x128xf32>
    %206 = vector.extract_strided_slice %192 {offsets = [56, 0], sizes = [8, 128], strides = [1, 1]} : vector<64x128xf32> to vector<8x128xf32>
    %207 = arith.addf %205, %206 : vector<8x128xf32>
    %cst_68 = arith.constant 1.250000e-01 : f32
    %208 = vector.broadcast %cst_68 : f32 to vector<8x128xf32>
    %209 = arith.mulf %207, %208 : vector<8x128xf32>
    %c3_69 = arith.constant 3 : index
    %c0_70 = arith.constant 0 : index
    %c0_71 = arith.constant 0 : index
    %210 = vector.load %arg9[%c3_69, %c0_70, %c0_71] : memref<4x8x128xf32, #tpu.memory_space<vmem>>, vector<1x8x128xf32>
    %211 = vector.shape_cast %210 : vector<1x8x128xf32> to vector<8x128xf32>
    %212 = vector.shape_cast %209 : vector<8x128xf32> to vector<1x8x128xf32>
    tpu.vector_store %arg9[%c3_69, %c0_70, %c0_71], %212 {strides = array<i32>} : memref<4x8x128xf32, #tpu.memory_space<vmem>>, vector<1x8x128xf32>,
    %213 = arith.truncf %192 : vector<64x128xf32> to vector<64x128xbf16>
    %cst_72 = arith.constant dense<0.000000e+00> : vector<40x128xf32>
    %214 = tpu.matmul %1, %213, %cst_72 {dimension_numbers = #tpu.dot_dimension_numbers<[1], [0], [0], [1], [0, 0, 1, 1], [], []>} : vector<40x64xbf16>, vector<64x128xbf16>, vector<40x128xf32> -> vector<40x128xf32>
    %215 = arith.addf %214, %7 : vector<40x128xf32>
    %cst_73 = arith.constant 0.000000e+00 : f32
    %216 = vector.broadcast %cst_73 : f32 to vector<40x128xf32>
    %217 = arith.cmpf ogt, %215, %216 : vector<40x128xf32>
    %cst_74 = arith.constant 1.000000e-01 : f32
    %218 = vector.broadcast %cst_74 : f32 to vector<40x128xf32>
    %219 = arith.mulf %218, %215 : vector<40x128xf32>
    %220 = arith.select %217, %215, %219 : vector<40x128xi1>, vector<40x128xf32>
    %221 = vector.extract_strided_slice %220 {offsets = [0, 0], sizes = [8, 128], strides = [1, 1]} : vector<40x128xf32> to vector<8x128xf32>
    %222 = vector.extract_strided_slice %220 {offsets = [8, 0], sizes = [8, 128], strides = [1, 1]} : vector<40x128xf32> to vector<8x128xf32>
    %223 = arith.addf %221, %222 : vector<8x128xf32>
    %224 = vector.extract_strided_slice %220 {offsets = [16, 0], sizes = [8, 128], strides = [1, 1]} : vector<40x128xf32> to vector<8x128xf32>
    %225 = arith.addf %223, %224 : vector<8x128xf32>
    %226 = vector.extract_strided_slice %220 {offsets = [24, 0], sizes = [8, 128], strides = [1, 1]} : vector<40x128xf32> to vector<8x128xf32>
    %227 = arith.addf %225, %226 : vector<8x128xf32>
    %228 = vector.extract_strided_slice %220 {offsets = [32, 0], sizes = [8, 128], strides = [1, 1]} : vector<40x128xf32> to vector<8x128xf32>
    %229 = arith.addf %227, %228 : vector<8x128xf32>
    %cst_75 = arith.constant 2.000000e-01 : f32
    %230 = vector.broadcast %cst_75 : f32 to vector<8x128xf32>
    %231 = arith.mulf %229, %230 : vector<8x128xf32>
    %c3_76 = arith.constant 3 : index
    %c0_77 = arith.constant 0 : index
    %c0_78 = arith.constant 0 : index
    %232 = vector.load %arg10[%c3_76, %c0_77, %c0_78] : memref<4x8x128xf32, #tpu.memory_space<vmem>>, vector<1x8x128xf32>
    %233 = vector.shape_cast %232 : vector<1x8x128xf32> to vector<8x128xf32>
    %234 = vector.shape_cast %231 : vector<8x128xf32> to vector<1x8x128xf32>
    tpu.vector_store %arg10[%c3_76, %c0_77, %c0_78], %234 {strides = array<i32>} : memref<4x8x128xf32, #tpu.memory_space<vmem>>, vector<1x8x128xf32>,
    %235 = vector.extract_strided_slice %8 {offsets = [3, 0, 0], sizes = [1, 3, 40], strides = [1, 1, 1]} : vector<4x3x40xbf16> to vector<1x3x40xbf16>
    %236 = vector.shape_cast %235 : vector<1x3x40xbf16> to vector<3x40xbf16>
    %237 = arith.truncf %220 : vector<40x128xf32> to vector<40x128xbf16>
    %cst_79 = arith.constant dense<0.000000e+00> : vector<3x128xf32>
    %238 = tpu.matmul %236, %237, %cst_79 {dimension_numbers = #tpu.dot_dimension_numbers<[1], [0], [0], [1], [0, 0, 1, 1], [], []>} : vector<3x40xbf16>, vector<40x128xbf16>, vector<3x128xf32> -> vector<3x128xf32>
    %239 = arith.addf %182, %238 : vector<3x128xf32>
    %c0_80 = arith.constant 0 : index
    %c0_81 = arith.constant 0 : index
    %240 = vector.load %arg8[%c0_80, %c0_81] : memref<3x128xf32, #tpu.memory_space<vmem>>, vector<3x128xf32>
    tpu.vector_store %arg8[%c0_80, %c0_81], %239 {strides = array<i32>} : memref<3x128xf32, #tpu.memory_space<vmem>>, vector<3x128xf32>,
    return
  }
  func.func @transform_0(%arg0: i32) -> (i32, i32, i32) {
    %c0_i32 = arith.constant 0 : i32
    %c0_i32_0 = arith.constant 0 : i32
    %c0_i32_1 = arith.constant 0 : i32
    return %c0_i32, %c0_i32_0, %arg0 : i32, i32, i32
  }
  func.func @transform_1(%arg0: i32) -> (i32, i32) {
    %c0_i32 = arith.constant 0 : i32
    %c0_i32_0 = arith.constant 0 : i32
    %c0_i32_1 = arith.constant 0 : i32
    return %c0_i32, %c0_i32_0 : i32, i32
  }
  func.func @transform_2(%arg0: i32) -> (i32, i32) {
    %c0_i32 = arith.constant 0 : i32
    %c0_i32_0 = arith.constant 0 : i32
    %c0_i32_1 = arith.constant 0 : i32
    return %c0_i32, %c0_i32_0 : i32, i32
  }
  func.func @transform_3(%arg0: i32) -> (i32, i32) {
    %c0_i32 = arith.constant 0 : i32
    %c0_i32_0 = arith.constant 0 : i32
    %c0_i32_1 = arith.constant 0 : i32
    return %c0_i32, %c0_i32_0 : i32, i32
  }
  func.func @transform_4(%arg0: i32) -> (i32, i32) {
    %c0_i32 = arith.constant 0 : i32
    %c0_i32_0 = arith.constant 0 : i32
    %c0_i32_1 = arith.constant 0 : i32
    return %c0_i32, %c0_i32_0 : i32, i32
  }
  func.func @transform_5(%arg0: i32) -> (i32, i32, i32) {
    %c0_i32 = arith.constant 0 : i32
    %c0_i32_0 = arith.constant 0 : i32
    %c0_i32_1 = arith.constant 0 : i32
    %c0_i32_2 = arith.constant 0 : i32
    return %c0_i32, %c0_i32_0, %c0_i32_1 : i32, i32, i32
  }
  func.func @transform_6(%arg0: i32) -> (i32, i32) {
    %c0_i32 = arith.constant 0 : i32
    %c0_i32_0 = arith.constant 0 : i32
    %c0_i32_1 = arith.constant 0 : i32
    return %c0_i32, %c0_i32_0 : i32, i32
  }
  func.func @transform_7(%arg0: i32) -> (i32, i32) {
    %c0_i32 = arith.constant 0 : i32
    %c0_i32_0 = arith.constant 0 : i32
    return %c0_i32, %arg0 : i32, i32
  }
  func.func @transform_8(%arg0: i32) -> (i32, i32, i32) {
    %c0_i32 = arith.constant 0 : i32
    %c0_i32_0 = arith.constant 0 : i32
    %c0_i32_1 = arith.constant 0 : i32
    return %c0_i32, %c0_i32_0, %arg0 : i32, i32, i32
  }
  func.func @transform_9(%arg0: i32) -> (i32, i32, i32) {
    %c0_i32 = arith.constant 0 : i32
    %c0_i32_0 = arith.constant 0 : i32
    %c0_i32_1 = arith.constant 0 : i32
    return %c0_i32, %c0_i32_0, %arg0 : i32, i32, i32
  }
}

</mosaic_0001>

<llo_original>
// kernel: _lambda_.1
$region0: #{_lambda_.1}
  #allocation0 [shape = 'u32[]', space=smem, size = 0x4, offset = 0x4, fixed_abs, tag = 'smem constant byte address 0x4 - core index']
  #allocation1 [shape = 'u32[144,128]{1,0:T(1,128)}', space=vmem, size = 0x12000, scoped, tag = 'internal scratch']
  %s0 = inlined_call_operand.vmem [shape: f32[4,11,256], index: 0, kind: input, shape index: {}]
  %s1 = inlined_call_operand.vmem [shape: bf16[64,11], index: 1, kind: input, shape index: {}]
  %s2 = inlined_call_operand.vmem [shape: bf16[40,64], index: 2, kind: input, shape index: {}]
  %s3 = inlined_call_operand.vmem [shape: f32[64,1], index: 3, kind: input, shape index: {}]
  %s4 = inlined_call_operand.vmem [shape: f32[40,1], index: 4, kind: input, shape index: {}]
  %s5 = inlined_call_operand.vmem [shape: bf16[4,3,40], index: 5, kind: input, shape index: {}]
  %s6 = inlined_call_operand.vmem [shape: f32[3,1], index: 6, kind: input, shape index: {}]
  %s7 = inlined_call_operand.hbm [shape: f32[3,256], index: 7, kind: output, shape index: {0}]
  %s8 = inlined_call_operand.vmem [shape: f32[4,8,256], index: 8, kind: output, shape index: {1}]
  %s9 = inlined_call_operand.vmem [shape: f32[4,8,256], index: 9, kind: output, shape index: {2}]
  %10 = xla_tuple %s7, %s8, %s9
  %s11 = sld [smem:[#allocation0]]
  $region183: #{_lambda_.1} parent=0
    _
  %s13 = ssub.s32 1, %s11
  %s14 = scalar_select 0, %s13, %s11
  $region1: #{_lambda_.1} parent=0
    #allocation2 [shape = 'u8[65536]{0}', space=vmem, size = 0x10000, scoped, tag = 'input window, operand 0']
    #allocation3 [shape = 'u8[4096]{0}', space=vmem, size = 0x1000, scoped, tag = 'output window, operand 0']
    #allocation4 [shape = 's32[2]{0}', space=sflag, size = 0x8, scoped, tag = 'scoped memory for _lambda_.1']
    #allocation5 [shape = 'u8[32768]{0}', space=vmem, size = 0x8000, scoped, tag = 'output window, operand 1']
    #allocation6 [shape = 'u8[32768]{0}', space=vmem, size = 0x8000, scoped, tag = 'output window, operand 2']
    %15 = vsyncpa [#allocation4], 0
    %s16 = scalar_lea.sflag [#allocation4], 1
    %17 = vsyncpa %s16, 0
    loop: start=0, step=1, limit=4
    $region2: #{_lambda_.1} parent=1 // loop_pre_header
      _
    $region3: #{_lambda_.1} parent=1 // loop_header
      %s19 = sphi 0, %s23
      %p20 = scmp.ge.s32.totalorder %s19, 4
      %s29 = sphi 0, %s31
      %s32 = sphi 0, %s29
      %s33 = sphi 0, %s32
      %s49 = sphi 0, %s33
      %s53 = sphi 0, %s53
      %s55 = sphi 0, %s53
      %s56 = sphi 0, %s55
      %s70 = sphi 0, %s56
      %s74 = sphi 0, %s74
      %s76 = sphi 0, %s74
      %s77 = sphi 0, %s76
      %s91 = sphi 0, %s77
      %s95 = sphi 0, %s95
      %s97 = sphi 0, %s95
      %s98 = sphi 0, %s97
      %s112 = sphi 0, %s98
      %s116 = sphi 0, %s116
      %s118 = sphi 0, %s116
      %s119 = sphi 0, %s118
      %s133 = sphi 0, %s119
      %s137 = sphi 0, %s137
      %s139 = sphi 0, %s137
      %s140 = sphi 0, %s139
      %s154 = sphi 0, %s140
      %s158 = sphi 0, %s158
      %s160 = sphi 0, %s158
      %s161 = sphi 0, %s160
      %s175 = sphi 0, %s161
      %s181 = sphi 0, %s183
      %s184 = sphi 0, %s181
      %s185 = sphi 0, %s184
      %s201 = sphi 0, %s185
      %s207 = sphi 0, %s209
      %s210 = sphi 0, %s207
      %s211 = sphi 0, %s210
      %s227 = sphi 0, %s211
      %s233 = sphi 0, %s235
      %s236 = sphi 0, %s233
      %s237 = sphi 0, %s236
      %s253 = sphi 0, %s237
    $region4: #{_lambda_.1} parent=1 // loop_header_branch
      %22 = sbr.rel (%p20) target = $region8
    $region5: #{_lambda_.1} parent=1 // loop_body
      %s24 = ssub.s32 %s19, 1
      %s25 = ssub.s32 %s19, 2
      %s26 = sadd.s32 %s19, 1
      %s27 = ssub.s32 %s19, %s26
      %p28 = scmp.eq.s32.totalorder %s27, 0
      %s30 = sadd.s32 %s29, 1
      %s31 = scalar_select %p28, %s29, %s30
      %p34 = pneg %p28
      %p35 = scmp.eq.s32.totalorder %s19, 1
      %p36 = por %p34, %p35
      %p37 = scmp.ne.s32.totalorder %s29, %s32
      %p38 = scmp.eq.s32.totalorder %s19, 0
      %p39 = por %p37, %p38
      %p40 = scmp.ne.s32.totalorder %s29, %s32
      %p41 = scmp.eq.s32.totalorder %s24, 1
      %p42 = por %p40, %p41
      %p43 = scmp.ne.s32.totalorder %s32, %s33
      %p44 = scmp.eq.s32.totalorder %s24, 0
      %p45 = por %p43, %p44
      %p46 = scmp.ne.s32.totalorder %s32, %s33
      %p47 = scmp.eq.s32.totalorder %s25, 1
      %p48 = por %p46, %p47
      %p50 = scmp.ne.s32.totalorder %s33, %s49
      %p51 = scmp.eq.s32.totalorder %s25, 0
      %p52 = por %p50, %p51
      %s54 = sadd.s32 %s53, 1
      %p57 = scmp.eq.s32.totalorder %s19, 1
      %p58 = scmp.ne.s32.totalorder %s53, %s55
      %p59 = scmp.eq.s32.totalorder %s19, 0
      %p60 = por %p58, %p59
      %p61 = scmp.ne.s32.totalorder %s53, %s55
      %p62 = scmp.eq.s32.totalorder %s24, 1
      %p63 = por %p61, %p62
      %p64 = scmp.ne.s32.totalorder %s55, %s56
      %p65 = scmp.eq.s32.totalorder %s24, 0
      %p66 = por %p64, %p65
      %p67 = scmp.ne.s32.totalorder %s55, %s56
      %p68 = scmp.eq.s32.totalorder %s25, 1
      %p69 = por %p67, %p68
      %p71 = scmp.ne.s32.totalorder %s56, %s70
      %p72 = scmp.eq.s32.totalorder %s25, 0
      %p73 = por %p71, %p72
      %s75 = sadd.s32 %s74, 1
      %p78 = scmp.eq.s32.totalorder %s19, 1
      %p79 = scmp.ne.s32.totalorder %s74, %s76
      %p80 = scmp.eq.s32.totalorder %s19, 0
      %p81 = por %p79, %p80
      %p82 = scmp.ne.s32.totalorder %s74, %s76
      %p83 = scmp.eq.s32.totalorder %s24, 1
      %p84 = por %p82, %p83
      %p85 = scmp.ne.s32.totalorder %s76, %s77
      %p86 = scmp.eq.s32.totalorder %s24, 0
      %p87 = por %p85, %p86
      %p88 = scmp.ne.s32.totalorder %s76, %s77
      %p89 = scmp.eq.s32.totalorder %s25, 1
      %p90 = por %p88, %p89
      %p92 = scmp.ne.s32.totalorder %s77, %s91
      %p93 = scmp.eq.s32.totalorder %s25, 0
      %p94 = por %p92, %p93
      %s96 = sadd.s32 %s95, 1
      %p99 = scmp.eq.s32.totalorder %s19, 1
      %p100 = scmp.ne.s32.totalorder %s95, %s97
      %p101 = scmp.eq.s32.totalorder %s19, 0
      %p102 = por %p100, %p101
      %p103 = scmp.ne.s32.totalorder %s95, %s97
      %p104 = scmp.eq.s32.totalorder %s24, 1
      %p105 = por %p103, %p104
      %p106 = scmp.ne.s32.totalorder %s97, %s98
      %p107 = scmp.eq.s32.totalorder %s24, 0
      %p108 = por %p106, %p107
      %p109 = scmp.ne.s32.totalorder %s97, %s98
      %p110 = scmp.eq.s32.totalorder %s25, 1
      %p111 = por %p109, %p110
      %p113 = scmp.ne.s32.totalorder %s98, %s112
      %p114 = scmp.eq.s32.totalorder %s25, 0
      %p115 = por %p113, %p114
      %s117 = sadd.s32 %s116, 1
      %p120 = scmp.eq.s32.totalorder %s19, 1
      %p121 = scmp.ne.s32.totalorder %s116, %s118
      %p122 = scmp.eq.s32.totalorder %s19, 0
      %p123 = por %p121, %p122
      %p124 = scmp.ne.s32.totalorder %s116, %s118
      %p125 = scmp.eq.s32.totalorder %s24, 1
      %p126 = por %p124, %p125
      %p127 = scmp.ne.s32.totalorder %s118, %s119
      %p128 = scmp.eq.s32.totalorder %s24, 0
      %p129 = por %p127, %p128
      %p130 = scmp.ne.s32.totalorder %s118, %s119
      %p131 = scmp.eq.s32.totalorder %s25, 1
      %p132 = por %p130, %p131
      %p134 = scmp.ne.s32.totalorder %s119, %s133
      %p135 = scmp.eq.s32.totalorder %s25, 0
      %p136 = por %p134, %p135
      %s138 = sadd.s32 %s137, 1
      %p141 = scmp.eq.s32.totalorder %s19, 1
      %p142 = scmp.ne.s32.totalorder %s137, %s139
      %p143 = scmp.eq.s32.totalorder %s19, 0
      %p144 = por %p142, %p143
      %p145 = scmp.ne.s32.totalorder %s137, %s139
      %p146 = scmp.eq.s32.totalorder %s24, 1
      %p147 = por %p145, %p146
      %p148 = scmp.ne.s32.totalorder %s139, %s140
      %p149 = scmp.eq.s32.totalorder %s24, 0
      %p150 = por %p148, %p149
      %p151 = scmp.ne.s32.totalorder %s139, %s140
      %p152 = scmp.eq.s32.totalorder %s25, 1
      %p153 = por %p151, %p152
      %p155 = scmp.ne.s32.totalorder %s140, %s154
      %p156 = scmp.eq.s32.totalorder %s25, 0
      %p157 = por %p155, %p156
      %s159 = sadd.s32 %s158, 1
      %p162 = scmp.eq.s32.totalorder %s19, 1
      %p163 = scmp.ne.s32.totalorder %s158, %s160
      %p164 = scmp.eq.s32.totalorder %s19, 0
      %p165 = por %p163, %p164
      %p166 = scmp.ne.s32.totalorder %s158, %s160
      %p167 = scmp.eq.s32.totalorder %s24, 1
      %p168 = por %p166, %p167
      %p169 = scmp.ne.s32.totalorder %s160, %s161
      %p170 = scmp.eq.s32.totalorder %s24, 0
      %p171 = por %p169, %p170
      %p172 = scmp.ne.s32.totalorder %s160, %s161
      %p173 = scmp.eq.s32.totalorder %s25, 1
      %p174 = por %p172, %p173
      %p176 = scmp.ne.s32.totalorder %s161, %s175
      %p177 = scmp.eq.s32.totalorder %s25, 0
      %p178 = por %p176, %p177
      %s179 = ssub.s32 %s19, %s26
      %p180 = scmp.eq.s32.totalorder %s179, 0
      %s182 = sadd.s32 %s181, 1
      %s183 = scalar_select %p180, %s181, %s182
      %p186 = pneg %p180
      %p187 = scmp.eq.s32.totalorder %s19, 1
      %p188 = por %p186, %p187
      %p189 = scmp.ne.s32.totalorder %s181, %s184
      %p190 = scmp.eq.s32.totalorder %s19, 0
      %p191 = por %p189, %p190
      %p192 = scmp.ne.s32.totalorder %s181, %s184
      %p193 = scmp.eq.s32.totalorder %s24, 1
      %p194 = por %p192, %p193
      %p195 = scmp.ne.s32.totalorder %s184, %s185
      %p196 = scmp.eq.s32.totalorder %s24, 0
      %p197 = por %p195, %p196
      %p198 = scmp.ne.s32.totalorder %s184, %s185
      %p199 = scmp.eq.s32.totalorder %s25, 1
      %p200 = por %p198, %p199
      %p202 = scmp.ne.s32.totalorder %s185, %s201
      %p203 = scmp.eq.s32.totalorder %s25, 0
      %p204 = por %p202, %p203
      %s205 = ssub.s32 %s19, %s26
      %p206 = scmp.eq.s32.totalorder %s205, 0
      %s208 = sadd.s32 %s207, 1
      %s209 = scalar_select %p206, %s207, %s208
      %p212 = pneg %p206
      %p213 = scmp.eq.s32.totalorder %s19, 1
      %p214 = por %p212, %p213
      %p215 = scmp.ne.s32.totalorder %s207, %s210
      %p216 = scmp.eq.s32.totalorder %s19, 0
      %p217 = por %p215, %p216
      %p218 = scmp.ne.s32.totalorder %s207, %s210
      %p219 = scmp.eq.s32.totalorder %s24, 1
      %p220 = por %p218, %p219
      %p221 = scmp.ne.s32.totalorder %s210, %s211
      %p222 = scmp.eq.s32.totalorder %s24, 0
      %p223 = por %p221, %p222
      %p224 = scmp.ne.s32.totalorder %s210, %s211
      %p225 = scmp.eq.s32.totalorder %s25, 1
      %p226 = por %p224, %p225
      %p228 = scmp.ne.s32.totalorder %s211, %s227
      %p229 = scmp.eq.s32.totalorder %s25, 0
      %p230 = por %p228, %p229
      %s231 = ssub.s32 %s19, %s26
      %p232 = scmp.eq.s32.totalorder %s231, 0
      %s234 = sadd.s32 %s233, 1
      %s235 = scalar_select %p232, %s233, %s234
      %p238 = pneg %p232
      %p239 = scmp.eq.s32.totalorder %s19, 1
      %p240 = por %p238, %p239
      %p241 = scmp.ne.s32.totalorder %s233, %s236
      %p242 = scmp.eq.s32.totalorder %s19, 0
      %p243 = por %p241, %p242
      %p244 = scmp.ne.s32.totalorder %s233, %s236
      %p245 = scmp.eq.s32.totalorder %s24, 1
      %p246 = por %p244, %p245
      %p247 = scmp.ne.s32.totalorder %s236, %s237
      %p248 = scmp.eq.s32.totalorder %s24, 0
      %p249 = por %p247, %p248
      %p250 = scmp.ne.s32.totalorder %s236, %s237
      %p251 = scmp.eq.s32.totalorder %s25, 1
      %p252 = por %p250, %p251
      %p254 = scmp.ne.s32.totalorder %s237, %s253
      %p255 = scmp.eq.s32.totalorder %s25, 0
      %p256 = por %p254, %p255
      %p257 = scmp.le.s32.totalorder 1, %s19
      %p258 = scmp.lt.s32.totalorder %s19, 3
      %p259 = pnand %p257, %p258
      %p260 = pneg %p259
      // Predicated region
      $region9: #{_lambda_.1} parent=5 // pred_check
        _
      $region10: #{_lambda_.1} parent=5 // pred_check_branch
        %262 = sbr.rel (%p259) target = $region12
      $region11: #{_lambda_.1} parent=5 // pred_region
        %s263 = ssub.s32 %s19, 1
        // Predicated region
        $region13: #{_lambda_.1} parent=11 // pred_check
          %p264 = pneg %p66
        $region14: #{_lambda_.1} parent=11 // pred_check_branch
          %266 = sbr.rel (%p264) target = $region16
        $region15: #{_lambda_.1} parent=11 // pred_region
          _
        $region16: #{_lambda_.1} parent=11 // pred_fallthru
          _
        // Predicated region
        $region17: #{_lambda_.1} parent=11 // pred_check
          %p267 = pneg %p87
        $region18: #{_lambda_.1} parent=11 // pred_check_branch
          %269 = sbr.rel (%p267) target = $region20
        $region19: #{_lambda_.1} parent=11 // pred_region
          _
        $region20: #{_lambda_.1} parent=11 // pred_fallthru
          _
        // Predicated region
        $region21: #{_lambda_.1} parent=11 // pred_check
          %p270 = pneg %p108
        $region22: #{_lambda_.1} parent=11 // pred_check_branch
          %272 = sbr.rel (%p270) target = $region24
        $region23: #{_lambda_.1} parent=11 // pred_region
          _
        $region24: #{_lambda_.1} parent=11 // pred_fallthru
          _
        // Predicated region
        $region25: #{_lambda_.1} parent=11 // pred_check
          %p273 = pneg %p129
        $region26: #{_lambda_.1} parent=11 // pred_check_branch
          %275 = sbr.rel (%p273) target = $region28
        $region27: #{_lambda_.1} parent=11 // pred_region
          _
        $region28: #{_lambda_.1} parent=11 // pred_fallthru
          _
        // Predicated region
        $region29: #{_lambda_.1} parent=11 // pred_check
          %p276 = pneg %p150
        $region30: #{_lambda_.1} parent=11 // pred_check_branch
          %278 = sbr.rel (%p276) target = $region32
        $region31: #{_lambda_.1} parent=11 // pred_region
          _
        $region32: #{_lambda_.1} parent=11 // pred_fallthru
          _
        // Predicated region
        $region33: #{_lambda_.1} parent=11 // pred_check
          %p279 = pneg %p171
        $region34: #{_lambda_.1} parent=11 // pred_check_branch
          %281 = sbr.rel (%p279) target = $region36
        $region35: #{_lambda_.1} parent=11 // pred_region
          _
        $region36: #{_lambda_.1} parent=11 // pred_fallthru
          _
      $region12: #{_lambda_.1} parent=5 // pred_fallthru
        _
      %p282 = scmp.lt.s32.totalorder %s19, 2
      // Predicated region
      $region37: #{_lambda_.1} parent=5 // pred_check
        %p283 = pneg %p282
      $region38: #{_lambda_.1} parent=5 // pred_check_branch
        %285 = sbr.rel (%p283) target = $region40
      $region39: #{_lambda_.1} parent=5 // pred_region
        // Predicated region
        $region41: #{_lambda_.1} parent=39 // pred_check
          %p286 = pneg %p39
        $region42: #{_lambda_.1} parent=39 // pred_check_branch
          %288 = sbr.rel (%p286) target = $region44
        $region43: #{_lambda_.1} parent=39 // pred_region
          %s289 = sand.u32 %s29, 1
          %s290 = sand.u32 %s29, 1
          %s291 = smul.addr %s290, 64
          %s292 = scalar_lea.vmem [#allocation2], %s291
          %s293 = smul.addr %s19, 8
          %s294 = scalar_lea.vmem %s0, %s293
          // Predicated region
          $region45: #{_lambda_.1} parent=43 // pred_check
            _
          $region46: #{_lambda_.1} parent=43 // pred_check_branch
            %296 = sbr.rel (0) target = $region48
          $region47: #{_lambda_.1} parent=43 // pred_region
            // Predicated region
            $region49: #{_lambda_.1} parent=47 // pred_check
              _
            $region50: #{_lambda_.1} parent=47 // pred_check_branch
              %298 = sbr.rel (0) target = $region52
            $region51: #{_lambda_.1} parent=47 // pred_region
              // Predicated region
              $region64: #{_lambda_.1} parent=51 // pred_check
                _
              $region65: #{_lambda_.1} parent=51 // pred_check_branch
                %328 = sbr.rel (0) target = $region67
              $region66: #{_lambda_.1} parent=51 // pred_region
                loop: start=0, step=1, limit=1
                $region68: #{_lambda_.1} parent=66 // loop_pre_header
                  _
                $region69: #{_lambda_.1} parent=66 // loop_header
                  %s330 = sphi 0, %s334
                  %p331 = scmp.ge.s32.totalorder %s330, 1
                  %s335 = sphi %s294, %s294
                  %s336 = sphi %s292, %s292
                $region70: #{_lambda_.1} parent=66 // loop_header_branch
                  %333 = sbr.rel (%p331) target = $region74
                $region71: #{_lambda_.1} parent=66 // loop_body
                  %v337 = vld [vmem:[%s335] sm:$0xff]
                  %338 = vst [vmem:[%s336] sm:$0xff] %v337
                  %v339 = vld [vmem:[%s335 + $0x10] sm:$0xff]
                  %340 = vst [vmem:[%s336 + $0x8] sm:$0xff] %v339
                  %v341 = vld [vmem:[%s335 + $0x20] sm:$0xff]
                  %342 = vst [vmem:[%s336 + $0x10] sm:$0xff] %v341
                  %v343 = vld [vmem:[%s335 + $0x30] sm:$0xff]
                  %344 = vst [vmem:[%s336 + $0x18] sm:$0xff] %v343
                  %v345 = vld [vmem:[%s335 + $0x40] sm:$0xff]
                  %346 = vst [vmem:[%s336 + $0x20] sm:$0xff] %v345
                  %v347 = vld [vmem:[%s335 + $0x50] sm:$0xff]
                  %348 = vst [vmem:[%s336 + $0x28] sm:$0xff] %v347
                  %v349 = vld [vmem:[%s335 + $0x60] sm:$0xff]
                  %350 = vst [vmem:[%s336 + $0x30] sm:$0xff] %v349
                  %v351 = vld [vmem:[%s335 + $0x70] sm:$0xff]
                  %352 = vst [vmem:[%s336 + $0x38] sm:$0xff] %v351
                $region72: #{_lambda_.1} parent=66 // loop_footer
                  %s334 = sadd.s32 1, %s330
                $region73: #{_lambda_.1} parent=66 // loop_footer_branch
                  %329 = sbr.rel target = $region69
                $region74: #{_lambda_.1} parent=66 // loop_exit
                  _
              $region67: #{_lambda_.1} parent=51 // pred_fallthru
                _
              // Predicated region
              $region75: #{_lambda_.1} parent=51 // pred_check
                _
              $region76: #{_lambda_.1} parent=51 // pred_check_branch
                %354 = sbr.rel target = $region78
              $region77: #{_lambda_.1} parent=51 // pred_region
                _
              $region78: #{_lambda_.1} parent=51 // pred_fallthru
                _
            $region52: #{_lambda_.1} parent=47 // pred_fallthru
              _
            // Predicated region
            $region53: #{_lambda_.1} parent=47 // pred_check
              _
            $region54: #{_lambda_.1} parent=47 // pred_check_branch
              %300 = sbr.rel target = $region56
            $region55: #{_lambda_.1} parent=47 // pred_region
              %s302 = ssub.s32 256, 1
              loop: start=0, step=1, limit=1
              $region57: #{_lambda_.1} parent=55 // loop_pre_header
                _
              $region58: #{_lambda_.1} parent=55 // loop_header
                %s304 = sphi 0, %s308
                %p305 = scmp.ge.s32.totalorder %s304, 1
                %s309 = sphi %s294, %s294
                %s310 = sphi %s292, %s292
              $region59: #{_lambda_.1} parent=55 // loop_header_branch
                %307 = sbr.rel (%p305) target = $region63
              $region60: #{_lambda_.1} parent=55 // loop_body
                %v311 = vld [vmem:[%s309] sm:%s302]
                %312 = vst [vmem:[%s310] sm:%s302] %v311
                %v313 = vld [vmem:[%s309 + $0x10] sm:%s302]
                %314 = vst [vmem:[%s310 + $0x8] sm:%s302] %v313
                %v315 = vld [vmem:[%s309 + $0x20] sm:%s302]
                %316 = vst [vmem:[%s310 + $0x10] sm:%s302] %v315
                %v317 = vld [vmem:[%s309 + $0x30] sm:%s302]
                %318 = vst [vmem:[%s310 + $0x18] sm:%s302] %v317
                %v319 = vld [vmem:[%s309 + $0x40] sm:%s302]
                %320 = vst [vmem:[%s310 + $0x20] sm:%s302] %v319
                %v321 = vld [vmem:[%s309 + $0x50] sm:%s302]
                %322 = vst [vmem:[%s310 + $0x28] sm:%s302] %v321
                %v323 = vld [vmem:[%s309 + $0x60] sm:%s302]
                %324 = vst [vmem:[%s310 + $0x30] sm:%s302] %v323
                %v325 = vld [vmem:[%s309 + $0x70] sm:%s302]
                %326 = vst [vmem:[%s310 + $0x38] sm:%s302] %v325
              $region61: #{_lambda_.1} parent=55 // loop_footer
                %s308 = sadd.s32 1, %s304
              $region62: #{_lambda_.1} parent=55 // loop_footer_branch
                %303 = sbr.rel target = $region58
              $region63: #{_lambda_.1} parent=55 // loop_exit
                _
            $region56: #{_lambda_.1} parent=47 // pred_fallthru
              _
          $region48: #{_lambda_.1} parent=43 // pred_fallthru
            _
          %355 = vnop
        $region44: #{_lambda_.1} parent=39 // pred_fallthru
          _
      $region40: #{_lambda_.1} parent=5 // pred_fallthru
        _
      %p356 = scmp.le.s32.totalorder 1, %s19
      %p357 = scmp.lt.s32.totalorder %s19, 3
      %p358 = pnand %p356, %p357
      %p359 = pneg %p358
      // Predicated region
      $region79: #{_lambda_.1} parent=5 // pred_check
        _
      $region80: #{_lambda_.1} parent=5 // pred_check_branch
        %361 = sbr.rel (%p358) target = $region82
      $region81: #{_lambda_.1} parent=5 // pred_region
        %s362 = ssub.s32 %s19, 1
        %s363 = sand.u32 %s32, 1
        %s364 = sand.u32 %s32, 1
        %s365 = smul.addr %s364, 64
        %s366 = scalar_lea.vmem [#allocation2], %s365
        // Predicated region
        $region83: #{_lambda_.1} parent=81 // pred_check
          %p367 = pneg %p45
        $region84: #{_lambda_.1} parent=81 // pred_check_branch
          %369 = sbr.rel (%p367) target = $region86
        $region85: #{_lambda_.1} parent=81 // pred_region
          _
        $region86: #{_lambda_.1} parent=81 // pred_fallthru
          _
        %s370 = sand.u32 %s32, 1
        %s371 = sand.u32 %s32, 1
        %s372 = smul.addr %s371, 64
        %s373 = scalar_lea.vmem [#allocation2], %s372
        %p374 = pneg %p45
        %p375 = pneg %p42
        %p376 = pneg %p66
        %p377 = pneg %p63
        %p378 = pneg %p87
        %p379 = pneg %p84
        %p380 = pneg %p108
        %p381 = pneg %p105
        %p382 = pneg %p129
        %p383 = pneg %p126
        %p384 = pneg %p150
        %p385 = pneg %p147
        %p386 = pneg %p171
        %p387 = pneg %p168
        %p388 = pneg %p197
        %p389 = pneg %p194
        %s390 = sand.u32 %s184, 1
        %s391 = scalar_lea.sflag [#allocation4], %s390
        %s392 = sand.u32 %s184, 1
        %s393 = smul.addr %s392, 4
        %s394 = scalar_lea.vmem [#allocation3], %s393
        %p395 = pneg %p223
        %p396 = pneg %p220
        %s397 = sand.u32 %s210, 1
        %s398 = sand.u32 %s210, 1
        %s399 = smul.addr %s398, 32
        %s400 = scalar_lea.vmem [#allocation5], %s399
        %p401 = pneg %p249
        %p402 = pneg %p246
        %s403 = sand.u32 %s236, 1
        %s404 = sand.u32 %s236, 1
        %s405 = smul.addr %s404, 32
        %s406 = scalar_lea.vmem [#allocation6], %s405
        %v408 = vld [vmem:[%s1] sm:$0xf]
        %v409 = vld [vmem:[%s1 + $0x4] sm:$0xf]
        %v410 = vld [vmem:[%s1 + $0x8] sm:$0xf]
        %v411 = vld [vmem:[%s1 + $0xc] sm:$0xf]
        %v412 = vld [vmem:[%s1 + $0x10] sm:$0xf]
        %v413 = vld [vmem:[%s1 + $0x14] sm:$0xf]
        %v414 = vld [vmem:[%s1 + $0x18] sm:$0xf]
        %v415 = vld [vmem:[%s1 + $0x1c] sm:$0xf]
        %v416 = vld [vmem:[%s2] sm:$0xf]
        %v417 = vld [vmem:[%s2 + $0x4] sm:$0xf]
        %v418 = vld [vmem:[%s2 + $0x8] sm:$0xf]
        %v419 = vld [vmem:[%s2 + $0xc] sm:$0xf]
        %v420 = vld [vmem:[%s2 + $0x10] sm:$0xf]
        %v421 = vld [vmem:[%s3] sm:$0xff]
        %v422 = vld [vmem:[%s3 + $0x8] sm:$0xff]
        %v423 = vld [vmem:[%s3 + $0x10] sm:$0xff]
        %v424 = vld [vmem:[%s3 + $0x18] sm:$0xff]
        %v425 = vld [vmem:[%s3 + $0x20] sm:$0xff]
        %v426 = vld [vmem:[%s3 + $0x28] sm:$0xff]
        %v427 = vld [vmem:[%s3 + $0x30] sm:$0xff]
        %v428 = vld [vmem:[%s3 + $0x38] sm:$0xff]
        %430 = vset.pattern.permute.xlu0 0
        %431 = vperm.xlu0 %430, %v421
        %v432 = vpop.permute.xlu0 %431
        %435 = vset.pattern.permute.xlu0 0
        %436 = vperm.xlu0 %435, %v422
        %v437 = vpop.permute.xlu0 %436
        %440 = vset.pattern.permute.xlu0 0
        %441 = vperm.xlu0 %440, %v423
        %v442 = vpop.permute.xlu0 %441
        %445 = vset.pattern.permute.xlu0 0
        %446 = vperm.xlu0 %445, %v424
        %v447 = vpop.permute.xlu0 %446
        %450 = vset.pattern.permute.xlu0 0
        %451 = vperm.xlu0 %450, %v425
        %v452 = vpop.permute.xlu0 %451
        %455 = vset.pattern.permute.xlu0 0
        %456 = vperm.xlu0 %455, %v426
        %v457 = vpop.permute.xlu0 %456
        %460 = vset.pattern.permute.xlu0 0
        %461 = vperm.xlu0 %460, %v427
        %v462 = vpop.permute.xlu0 %461
        %465 = vset.pattern.permute.xlu0 0
        %466 = vperm.xlu0 %465, %v428
        %v467 = vpop.permute.xlu0 %466
        %v469 = vld [vmem:[%s4] sm:$0xff]
        %v470 = vld [vmem:[%s4 + $0x8] sm:$0xff]
        %v471 = vld [vmem:[%s4 + $0x10] sm:$0xff]
        %v472 = vld [vmem:[%s4 + $0x18] sm:$0xff]
        %v473 = vld [vmem:[%s4 + $0x20] sm:$0xff]
        %475 = vset.pattern.permute.xlu0 0
        %476 = vperm.xlu0 %475, %v469
        %v477 = vpop.permute.xlu0 %476
        %480 = vset.pattern.permute.xlu0 0
        %481 = vperm.xlu0 %480, %v470
        %v482 = vpop.permute.xlu0 %481
        %485 = vset.pattern.permute.xlu0 0
        %486 = vperm.xlu0 %485, %v471
        %v487 = vpop.permute.xlu0 %486
        %490 = vset.pattern.permute.xlu0 0
        %491 = vperm.xlu0 %490, %v472
        %v492 = vpop.permute.xlu0 %491
        %495 = vset.pattern.permute.xlu0 0
        %496 = vperm.xlu0 %495, %v473
        %v497 = vpop.permute.xlu0 %496
        %v499 = vld [vmem:[%s5] sm:$0x3]
        %v500 = vld [vmem:[%s5 + $0x2] sm:$0x3]
        %v501 = vld [vmem:[%s5 + $0x4] sm:$0x3]
        %v502 = vld [vmem:[%s5 + $0x6] sm:$0x3]
        %v503 = vld [vmem:[%s6] sm:$0x7]
        %505 = vset.pattern.permute.xlu0 0
        %506 = vperm.xlu0 %505, %v503
        %v507 = vpop.permute.xlu0 %506
        %v509 = vld [vmem:[%s366] sm:$0xff]
        %v510 = vld [vmem:[%s366 + $0x8] sm:$0x7]
        %v511 = vpack.c.bf16 %v510, %v509
        %v520 = vunpack.c.l.b16 %v408
        %v521 = vunpack.c.l.b16 %v409
        %v522 = vunpack.c.l.b16 %v410
        %v523 = vunpack.c.l.b16 %v411
        %v524 = vunpack.c.l.b16 %v412
        %v525 = vunpack.c.l.b16 %v413
        %v526 = vunpack.c.l.b16 %v414
        %v527 = vunpack.c.l.b16 %v415
        %v528 = vpack.c.b16 %v521, %v520
        %v529 = vpack.c.b16 %v523, %v522
        %v530 = vpack.c.b16 %v525, %v524
        %v531 = vpack.c.b16 %v527, %v526
        %vm532 = vcmask 89088
        %v534 = vsel %vm532, %v528, 0
        %v537 = vsel %vm532, %v529, 0
        %v540 = vsel %vm532, %v530, 0
        %v543 = vsel %vm532, %v531, 0
        %vm545 = vcmask 1044480
        %vm546 = vcmask 1045504
        %v547 = vsel %vm545, 4294967295, 65535
        %v548 = vsel %vm546, %v547, 0
        %v550 = vand.u32 %v511, %v548
        %552 = vmatprep.subr.bf16.mxu0 0
        %553 = vmatpush1.bf16.msra.mxu0 0
        %554 = vmatprep.subr.bf16.mxu0 0
        %555 = vmatpush1.bf16.msra.mxu0 0
        %556 = vmatprep.subr.bf16.mxu0 0
        %557 = vmatpush1.bf16.msra.mxu0 0
        %558 = vmatprep.subr.bf16.mxu0 0
        %559 = vmatpush1.bf16.msra.mxu0 0
        %560 = vmatprep.subr.bf16.mxu0 0
        %561 = vmatpush1.bf16.msra.mxu0 0
        %562 = vmatprep.subr.bf16.mxu0 0
        %563 = vmatpush1.bf16.msra.mxu0 0
        %564 = vmatprep.subr.bf16.mxu0 0
        %565 = vmatpush1.bf16.msra.mxu0 0
        %566 = vmatprep.subr.bf16.mxu0 0
        %567 = vmatpush1.bf16.msra.mxu0 %v550
        %568 = vmatprep.subr.bf16.mxu0 0
        %569 = vmatpush2.bf16.msra.mxu0 0
        %570 = vmatprep.subr.bf16.mxu0 0
        %571 = vmatpush2.bf16.msra.mxu0 0
        %572 = vmatprep.subr.bf16.mxu0 0
        %573 = vmatpush2.bf16.msra.mxu0 0
        %574 = vmatprep.subr.bf16.mxu0 0
        %575 = vmatpush2.bf16.msra.mxu0 0
        %576 = vmatprep.subr.bf16.mxu0 0
        %577 = vmatpush2.bf16.msra.mxu0 0
        %578 = vmatprep.subr.bf16.mxu0 0
        %579 = vmatpush2.bf16.msra.mxu0 0
        %580 = vmatprep.subr.bf16.mxu0 0
        %581 = vmatpush2.bf16.msra.mxu0 0
        %582 = vmatprep.subr.bf16.mxu0 0
        %583 = vmatpush2.bf16.msra.mxu0 0
        %584 = vmatprep.mubr.bf16.mxu0 0
        %585 = vmatmul.mubr.bf16.gmra.mxu0 %v534
        %v586 = vpop.f32.mrf.mxu0
        %v587 = vadd.f32 %v432, %v586
        %v588 = vpop.f32.mrf.mxu0
        %v589 = vpop.f32.mrf.mxu0
        %v590 = vadd.f32 %v437, %v589
        %v591 = vpop.f32.mrf.mxu0
        %592 = vmatprep.mubr.bf16.mxu0 0
        %593 = vmatmul.mubr.bf16.gmra.mxu0 %v537
        %v594 = vpop.f32.mrf.mxu0
        %v595 = vadd.f32 %v442, %v594
        %v596 = vpop.f32.mrf.mxu0
        %v597 = vpop.f32.mrf.mxu0
        %v598 = vadd.f32 %v447, %v597
        %v599 = vpop.f32.mrf.mxu0
        %600 = vmatprep.mubr.bf16.mxu0 0
        %601 = vmatmul.mubr.bf16.gmra.mxu0 %v540
        %v602 = vpop.f32.mrf.mxu0
        %v603 = vadd.f32 %v452, %v602
        %v604 = vpop.f32.mrf.mxu0
        %v605 = vpop.f32.mrf.mxu0
        %v606 = vadd.f32 %v457, %v605
        %v607 = vpop.f32.mrf.mxu0
        %608 = vmatprep.mubr.bf16.mxu0 0
        %609 = vmatmul.mubr.bf16.gmra.mxu0 %v543
        %v610 = vpop.f32.mrf.mxu0
        %v611 = vadd.f32 %v462, %v610
        %v612 = vpop.f32.mrf.mxu0
        %v613 = vpop.f32.mrf.mxu0
        %v614 = vadd.f32 %v467, %v613
        %v615 = vpop.f32.mrf.mxu0
        %616 = vdwg.mxu0
        %vm617 = vcmp.gt.f32.partialorder %v587, 0.0
        %vm618 = vcmp.gt.f32.partialorder %v590, 0.0
        %vm619 = vcmp.gt.f32.partialorder %v595, 0.0
        %vm620 = vcmp.gt.f32.partialorder %v598, 0.0
        %vm621 = vcmp.gt.f32.partialorder %v603, 0.0
        %vm622 = vcmp.gt.f32.partialorder %v606, 0.0
        %vm623 = vcmp.gt.f32.partialorder %v611, 0.0
        %vm624 = vcmp.gt.f32.partialorder %v614, 0.0
        %v625 = vmul.f32 %v587, 0.1
        %v626 = vmul.f32 %v590, 0.1
        %v627 = vmul.f32 %v595, 0.1
        %v628 = vmul.f32 %v598, 0.1
        %v629 = vmul.f32 %v603, 0.1
        %v630 = vmul.f32 %v606, 0.1
        %v631 = vmul.f32 %v611, 0.1
        %v632 = vmul.f32 %v614, 0.1
        %v633 = vsel %vm617, %v587, %v625
        %v634 = vsel %vm618, %v590, %v626
        %v635 = vsel %vm619, %v595, %v627
        %v636 = vsel %vm620, %v598, %v628
        %v637 = vsel %vm621, %v603, %v629
        %v638 = vsel %vm622, %v606, %v630
        %v639 = vsel %vm623, %v611, %v631
        %v640 = vsel %vm624, %v614, %v632
        %v641 = vadd.f32 %v633, %v634
        %v642 = vadd.f32 %v641, %v635
        %v643 = vadd.f32 %v642, %v636
        %v644 = vadd.f32 %v643, %v637
        %v645 = vadd.f32 %v644, %v638
        %v646 = vadd.f32 %v645, %v639
        %v647 = vadd.f32 %v646, %v640
        %v648 = vmul.f32 %v647, 0.125
        %649 = vst [vmem:[%s400] sm:$0xff] %v648
        %v650 = vpack.c.bf16 %v634, %v633
        %v651 = vpack.c.bf16 %v636, %v635
        %v652 = vpack.c.bf16 %v638, %v637
        %v653 = vpack.c.bf16 %v640, %v639
        %v659 = vunpack.c.l.b16 %v416
        %v660 = vunpack.c.l.b16 %v417
        %v661 = vunpack.c.l.b16 %v418
        %v662 = vunpack.c.l.b16 %v419
        %v663 = vunpack.c.l.b16 %v420
        %v664 = vpack.c.b16 %v660, %v659
        %v665 = vpack.c.b16 %v662, %v661
        %v666 = vpack.c.b16 %v663, %v663
        %vm667 = vcmask 523264
        %v669 = vsel %vm667, %v664, 0
        %v672 = vsel %vm667, %v665, 0
        %v675 = vsel %vm667, %v666, 0
        %677 = vmatprep.subr.bf16.mxu0 0
        %678 = vmatpush1.bf16.msra.mxu0 0
        %679 = vmatprep.subr.bf16.mxu0 0
        %680 = vmatpush1.bf16.msra.mxu0 0
        %681 = vmatprep.subr.bf16.mxu0 0
        %682 = vmatpush1.bf16.msra.mxu0 0
        %683 = vmatprep.subr.bf16.mxu0 0
        %684 = vmatpush1.bf16.msra.mxu0 0
        %685 = vmatprep.subr.bf16.mxu0 0
        %686 = vmatpush1.bf16.msra.mxu0 %v653
        %687 = vmatprep.subr.bf16.mxu0 0
        %688 = vmatpush1.bf16.msra.mxu0 %v652
        %689 = vmatprep.subr.bf16.mxu0 0
        %690 = vmatpush1.bf16.msra.mxu0 %v651
        %691 = vmatprep.subr.bf16.mxu0 0
        %692 = vmatpush1.bf16.msra.mxu0 %v650
        %693 = vmatprep.subr.bf16.mxu0 0
        %694 = vmatpush2.bf16.msra.mxu0 0
        %695 = vmatprep.subr.bf16.mxu0 0
        %696 = vmatpush2.bf16.msra.mxu0 0
        %697 = vmatprep.subr.bf16.mxu0 0
        %698 = vmatpush2.bf16.msra.mxu0 0
        %699 = vmatprep.subr.bf16.mxu0 0
        %700 = vmatpush2.bf16.msra.mxu0 0
        %701 = vmatprep.subr.bf16.mxu0 0
        %702 = vmatpush2.bf16.msra.mxu0 0
        %703 = vmatprep.subr.bf16.mxu0 0
        %704 = vmatpush2.bf16.msra.mxu0 0
        %705 = vmatprep.subr.bf16.mxu0 0
        %706 = vmatpush2.bf16.msra.mxu0 0
        %707 = vmatprep.subr.bf16.mxu0 0
        %708 = vmatpush2.bf16.msra.mxu0 0
        %709 = vmatprep.mubr.bf16.mxu0 0
        %710 = vmatmul.mubr.bf16.gmra.mxu0 %v669
        %v711 = vpop.f32.mrf.mxu0
        %v712 = vadd.f32 %v477, %v711
        %v713 = vpop.f32.mrf.mxu0
        %v714 = vpop.f32.mrf.mxu0
        %v715 = vadd.f32 %v482, %v714
        %v716 = vpop.f32.mrf.mxu0
        %717 = vmatprep.mubr.bf16.mxu0 0
        %718 = vmatmul.mubr.bf16.gmra.mxu0 %v672
        %v719 = vpop.f32.mrf.mxu0
        %v720 = vadd.f32 %v487, %v719
        %v721 = vpop.f32.mrf.mxu0
        %v722 = vpop.f32.mrf.mxu0
        %v723 = vadd.f32 %v492, %v722
        %v724 = vpop.f32.mrf.mxu0
        %725 = vmatprep.mubr.bf16.mxu0 0
        %726 = vmatmul.mubr.bf16.gmra.mxu0 %v675
        %v727 = vpop.f32.mrf.mxu0
        %v728 = vadd.f32 %v497, %v727
        %v729 = vpop.f32.mrf.mxu0
        %v730 = vpop.f32.mrf.mxu0
        %v731 = vpop.f32.mrf.mxu0
        %732 = vdwg.mxu0
        %vm733 = vcmp.gt.f32.partialorder %v712, 0.0
        %vm734 = vcmp.gt.f32.partialorder %v715, 0.0
        %vm735 = vcmp.gt.f32.partialorder %v720, 0.0
        %vm736 = vcmp.gt.f32.partialorder %v723, 0.0
        %vm737 = vcmp.gt.f32.partialorder %v728, 0.0
        %v738 = vmul.f32 %v712, 0.1
        %v739 = vmul.f32 %v715, 0.1
        %v740 = vmul.f32 %v720, 0.1
        %v741 = vmul.f32 %v723, 0.1
        %v742 = vmul.f32 %v728, 0.1
        %v743 = vsel %vm733, %v712, %v738
        %v744 = vsel %vm734, %v715, %v739
        %v745 = vsel %vm735, %v720, %v740
        %v746 = vsel %vm736, %v723, %v741
        %v747 = vsel %vm737, %v728, %v742
        %v748 = vadd.f32 %v743, %v744
        %v749 = vadd.f32 %v748, %v745
        %v750 = vadd.f32 %v749, %v746
        %v751 = vadd.f32 %v750, %v747
        %v752 = vmul.f32 %v751, 0.2
        %753 = vst [vmem:[%s406] sm:$0xff] %v752
        %v754 = vpack.c.bf16 %v744, %v743
        %v755 = vpack.c.bf16 %v746, %v745
        %v756 = vpack.c.bf16 %v747, %v747
        %vm757 = vcmask 326656
        %v759 = vsel %vm757, %v499, 0
        %vm761 = vcmask 1043456
        %v763 = vsel %vm761, %v756, 0
        %765 = vmatprep.subr.bf16.mxu0 0
        %766 = vmatpush1.bf16.msra.mxu0 0
        %767 = vmatprep.subr.bf16.mxu0 0
        %768 = vmatpush1.bf16.msra.mxu0 0
        %769 = vmatprep.subr.bf16.mxu0 0
        %770 = vmatpush1.bf16.msra.mxu0 0
        %771 = vmatprep.subr.bf16.mxu0 0
        %772 = vmatpush1.bf16.msra.mxu0 0
        %773 = vmatprep.subr.bf16.mxu0 0
        %774 = vmatpush1.bf16.msra.mxu0 0
        %775 = vmatprep.subr.bf16.mxu0 0
        %776 = vmatpush1.bf16.msra.mxu0 %v763
        %777 = vmatprep.subr.bf16.mxu0 0
        %778 = vmatpush1.bf16.msra.mxu0 %v755
        %779 = vmatprep.subr.bf16.mxu0 0
        %780 = vmatpush1.bf16.msra.mxu0 %v754
        %781 = vmatprep.subr.bf16.mxu0 0
        %782 = vmatpush2.bf16.msra.mxu0 0
        %783 = vmatprep.subr.bf16.mxu0 0
        %784 = vmatpush2.bf16.msra.mxu0 0
        %785 = vmatprep.subr.bf16.mxu0 0
        %786 = vmatpush2.bf16.msra.mxu0 0
        %787 = vmatprep.subr.bf16.mxu0 0
        %788 = vmatpush2.bf16.msra.mxu0 0
        %789 = vmatprep.subr.bf16.mxu0 0
        %790 = vmatpush2.bf16.msra.mxu0 0
        %791 = vmatprep.subr.bf16.mxu0 0
        %792 = vmatpush2.bf16.msra.mxu0 0
        %793 = vmatprep.subr.bf16.mxu0 0
        %794 = vmatpush2.bf16.msra.mxu0 0
        %795 = vmatprep.subr.bf16.mxu0 0
        %796 = vmatpush2.bf16.msra.mxu0 0
        %797 = vmatprep.mubr.bf16.mxu0 0
        %798 = vmatmul.mubr.bf16.gmra.mxu0 %v759
        %v799 = vpop.f32.mrf.mxu0
        %v800 = vadd.f32 0.0, %v799
        %v801 = vpop.f32.mrf.mxu0
        %v802 = vpop.f32.mrf.mxu0
        %v803 = vpop.f32.mrf.mxu0
        %804 = vdwg.mxu0
        %v805 = vadd.f32 %v507, %v800
        %s806 = scalar_lea.vmem %s366, 16 [#allocation2]
        %v807 = vld [vmem:[%s806] sm:$0xff]
        %v808 = vld [vmem:[%s806 + $0x8] sm:$0x7]
        %v809 = vpack.c.bf16 %v808, %v807
        %v811 = vand.u32 %v809, %v548
        %813 = vmatprep.subr.bf16.mxu0 0
        %814 = vmatpush1.bf16.msra.mxu0 0
        %815 = vmatprep.subr.bf16.mxu0 0
        %816 = vmatpush1.bf16.msra.mxu0 0
        %817 = vmatprep.subr.bf16.mxu0 0
        %818 = vmatpush1.bf16.msra.mxu0 0
        %819 = vmatprep.subr.bf16.mxu0 0
        %820 = vmatpush1.bf16.msra.mxu0 0
        %821 = vmatprep.subr.bf16.mxu0 0
        %822 = vmatpush1.bf16.msra.mxu0 0
        %823 = vmatprep.subr.bf16.mxu0 0
        %824 = vmatpush1.bf16.msra.mxu0 0
        %825 = vmatprep.subr.bf16.mxu0 0
        %826 = vmatpush1.bf16.msra.mxu0 0
        %827 = vmatprep.subr.bf16.mxu0 0
        %828 = vmatpush1.bf16.msra.mxu0 %v811
        %829 = vmatprep.subr.bf16.mxu0 0
        %830 = vmatpush2.bf16.msra.mxu0 0
        %831 = vmatprep.subr.bf16.mxu0 0
        %832 = vmatpush2.bf16.msra.mxu0 0
        %833 = vmatprep.subr.bf16.mxu0 0
        %834 = vmatpush2.bf16.msra.mxu0 0
        %835 = vmatprep.subr.bf16.mxu0 0
        %836 = vmatpush2.bf16.msra.mxu0 0
        %837 = vmatprep.subr.bf16.mxu0 0
        %838 = vmatpush2.bf16.msra.mxu0 0
        %839 = vmatprep.subr.bf16.mxu0 0
        %840 = vmatpush2.bf16.msra.mxu0 0
        %841 = vmatprep.subr.bf16.mxu0 0
        %842 = vmatpush2.bf16.msra.mxu0 0
        %843 = vmatprep.subr.bf16.mxu0 0
        %844 = vmatpush2.bf16.msra.mxu0 0
        %845 = vmatprep.mubr.bf16.mxu0 0
        %846 = vmatmul.mubr.bf16.gmra.mxu0 %v534
        %v847 = vpop.f32.mrf.mxu0
        %v848 = vadd.f32 %v432, %v847
        %v849 = vpop.f32.mrf.mxu0
        %v850 = vpop.f32.mrf.mxu0
        %v851 = vadd.f32 %v437, %v850
        %v852 = vpop.f32.mrf.mxu0
        %853 = vmatprep.mubr.bf16.mxu0 0
        %854 = vmatmul.mubr.bf16.gmra.mxu0 %v537
        %v855 = vpop.f32.mrf.mxu0
        %v856 = vadd.f32 %v442, %v855
        %v857 = vpop.f32.mrf.mxu0
        %v858 = vpop.f32.mrf.mxu0
        %v859 = vadd.f32 %v447, %v858
        %v860 = vpop.f32.mrf.mxu0
        %861 = vmatprep.mubr.bf16.mxu0 0
        %862 = vmatmul.mubr.bf16.gmra.mxu0 %v540
        %v863 = vpop.f32.mrf.mxu0
        %v864 = vadd.f32 %v452, %v863
        %v865 = vpop.f32.mrf.mxu0
        %v866 = vpop.f32.mrf.mxu0
        %v867 = vadd.f32 %v457, %v866
        %v868 = vpop.f32.mrf.mxu0
        %869 = vmatprep.mubr.bf16.mxu0 0
        %870 = vmatmul.mubr.bf16.gmra.mxu0 %v543
        %v871 = vpop.f32.mrf.mxu0
        %v872 = vadd.f32 %v462, %v871
        %v873 = vpop.f32.mrf.mxu0
        %v874 = vpop.f32.mrf.mxu0
        %v875 = vadd.f32 %v467, %v874
        %v876 = vpop.f32.mrf.mxu0
        %877 = vdwg.mxu0
        %vm878 = vcmp.gt.f32.partialorder %v848, 0.0
        %vm879 = vcmp.gt.f32.partialorder %v851, 0.0
        %vm880 = vcmp.gt.f32.partialorder %v856, 0.0
        %vm881 = vcmp.gt.f32.partialorder %v859, 0.0
        %vm882 = vcmp.gt.f32.partialorder %v864, 0.0
        %vm883 = vcmp.gt.f32.partialorder %v867, 0.0
        %vm884 = vcmp.gt.f32.partialorder %v872, 0.0
        %vm885 = vcmp.gt.f32.partialorder %v875, 0.0
        %v886 = vmul.f32 %v848, 0.1
        %v887 = vmul.f32 %v851, 0.1
        %v888 = vmul.f32 %v856, 0.1
        %v889 = vmul.f32 %v859, 0.1
        %v890 = vmul.f32 %v864, 0.1
        %v891 = vmul.f32 %v867, 0.1
        %v892 = vmul.f32 %v872, 0.1
        %v893 = vmul.f32 %v875, 0.1
        %v894 = vsel %vm878, %v848, %v886
        %v895 = vsel %vm879, %v851, %v887
        %v896 = vsel %vm880, %v856, %v888
        %v897 = vsel %vm881, %v859, %v889
        %v898 = vsel %vm882, %v864, %v890
        %v899 = vsel %vm883, %v867, %v891
        %v900 = vsel %vm884, %v872, %v892
        %v901 = vsel %vm885, %v875, %v893
        %v902 = vadd.f32 %v894, %v895
        %v903 = vadd.f32 %v902, %v896
        %v904 = vadd.f32 %v903, %v897
        %v905 = vadd.f32 %v904, %v898
        %v906 = vadd.f32 %v905, %v899
        %v907 = vadd.f32 %v906, %v900
        %v908 = vadd.f32 %v907, %v901
        %v909 = vmul.f32 %v908, 0.125
        %s910 = scalar_lea.vmem %s400, 8 [#allocation5]
        %911 = vst [vmem:[%s910] sm:$0xff] %v909
        %v912 = vpack.c.bf16 %v895, %v894
        %v913 = vpack.c.bf16 %v897, %v896
        %v914 = vpack.c.bf16 %v899, %v898
        %v915 = vpack.c.bf16 %v901, %v900
        %916 = vmatprep.subr.bf16.mxu0 0
        %917 = vmatpush1.bf16.msra.mxu0 0
        %918 = vmatprep.subr.bf16.mxu0 0
        %919 = vmatpush1.bf16.msra.mxu0 0
        %920 = vmatprep.subr.bf16.mxu0 0
        %921 = vmatpush1.bf16.msra.mxu0 0
        %922 = vmatprep.subr.bf16.mxu0 0
        %923 = vmatpush1.bf16.msra.mxu0 0
        %924 = vmatprep.subr.bf16.mxu0 0
        %925 = vmatpush1.bf16.msra.mxu0 %v915
        %926 = vmatprep.subr.bf16.mxu0 0
        %927 = vmatpush1.bf16.msra.mxu0 %v914
        %928 = vmatprep.subr.bf16.mxu0 0
        %929 = vmatpush1.bf16.msra.mxu0 %v913
        %930 = vmatprep.subr.bf16.mxu0 0
        %931 = vmatpush1.bf16.msra.mxu0 %v912
        %932 = vmatprep.subr.bf16.mxu0 0
        %933 = vmatpush2.bf16.msra.mxu0 0
        %934 = vmatprep.subr.bf16.mxu0 0
        %935 = vmatpush2.bf16.msra.mxu0 0
        %936 = vmatprep.subr.bf16.mxu0 0
        %937 = vmatpush2.bf16.msra.mxu0 0
        %938 = vmatprep.subr.bf16.mxu0 0
        %939 = vmatpush2.bf16.msra.mxu0 0
        %940 = vmatprep.subr.bf16.mxu0 0
        %941 = vmatpush2.bf16.msra.mxu0 0
        %942 = vmatprep.subr.bf16.mxu0 0
        %943 = vmatpush2.bf16.msra.mxu0 0
        %944 = vmatprep.subr.bf16.mxu0 0
        %945 = vmatpush2.bf16.msra.mxu0 0
        %946 = vmatprep.subr.bf16.mxu0 0
        %947 = vmatpush2.bf16.msra.mxu0 0
        %948 = vmatprep.mubr.bf16.mxu0 0
        %949 = vmatmul.mubr.bf16.gmra.mxu0 %v669
        %v950 = vpop.f32.mrf.mxu0
        %v951 = vadd.f32 %v477, %v950
        %v952 = vpop.f32.mrf.mxu0
        %v953 = vpop.f32.mrf.mxu0
        %v954 = vadd.f32 %v482, %v953
        %v955 = vpop.f32.mrf.mxu0
        %956 = vmatprep.mubr.bf16.mxu0 0
        %957 = vmatmul.mubr.bf16.gmra.mxu0 %v672
        %v958 = vpop.f32.mrf.mxu0
        %v959 = vadd.f32 %v487, %v958
        %v960 = vpop.f32.mrf.mxu0
        %v961 = vpop.f32.mrf.mxu0
        %v962 = vadd.f32 %v492, %v961
        %v963 = vpop.f32.mrf.mxu0
        %964 = vmatprep.mubr.bf16.mxu0 0
        %965 = vmatmul.mubr.bf16.gmra.mxu0 %v675
        %v966 = vpop.f32.mrf.mxu0
        %v967 = vadd.f32 %v497, %v966
        %v968 = vpop.f32.mrf.mxu0
        %v969 = vpop.f32.mrf.mxu0
        %v970 = vpop.f32.mrf.mxu0
        %971 = vdwg.mxu0
        %vm972 = vcmp.gt.f32.partialorder %v951, 0.0
        %vm973 = vcmp.gt.f32.partialorder %v954, 0.0
        %vm974 = vcmp.gt.f32.partialorder %v959, 0.0
        %vm975 = vcmp.gt.f32.partialorder %v962, 0.0
        %vm976 = vcmp.gt.f32.partialorder %v967, 0.0
        %v977 = vmul.f32 %v951, 0.1
        %v978 = vmul.f32 %v954, 0.1
        %v979 = vmul.f32 %v959, 0.1
        %v980 = vmul.f32 %v962, 0.1
        %v981 = vmul.f32 %v967, 0.1
        %v982 = vsel %vm972, %v951, %v977
        %v983 = vsel %vm973, %v954, %v978
        %v984 = vsel %vm974, %v959, %v979
        %v985 = vsel %vm975, %v962, %v980
        %v986 = vsel %vm976, %v967, %v981
        %v987 = vadd.f32 %v982, %v983
        %v988 = vadd.f32 %v987, %v984
        %v989 = vadd.f32 %v988, %v985
        %v990 = vadd.f32 %v989, %v986
        %v991 = vmul.f32 %v990, 0.2
        %s992 = scalar_lea.vmem %s406, 8 [#allocation6]
        %993 = vst [vmem:[%s992] sm:$0xff] %v991
        %v994 = vpack.c.bf16 %v983, %v982
        %v995 = vpack.c.bf16 %v985, %v984
        %v996 = vpack.c.bf16 %v986, %v986
        %v998 = vsel %vm757, %v500, 0
        %v1001 = vsel %vm761, %v996, 0
        %1003 = vmatprep.subr.bf16.mxu0 0
        %1004 = vmatpush1.bf16.msra.mxu0 0
        %1005 = vmatprep.subr.bf16.mxu0 0
        %1006 = vmatpush1.bf16.msra.mxu0 0
        %1007 = vmatprep.subr.bf16.mxu0 0
        %1008 = vmatpush1.bf16.msra.mxu0 0
        %1009 = vmatprep.subr.bf16.mxu0 0
        %1010 = vmatpush1.bf16.msra.mxu0 0
        %1011 = vmatprep.subr.bf16.mxu0 0
        %1012 = vmatpush1.bf16.msra.mxu0 0
        %1013 = vmatprep.subr.bf16.mxu0 0
        %1014 = vmatpush1.bf16.msra.mxu0 %v1001
        %1015 = vmatprep.subr.bf16.mxu0 0
        %1016 = vmatpush1.bf16.msra.mxu0 %v995
        %1017 = vmatprep.subr.bf16.mxu0 0
        %1018 = vmatpush1.bf16.msra.mxu0 %v994
        %1019 = vmatprep.subr.bf16.mxu0 0
        %1020 = vmatpush2.bf16.msra.mxu0 0
        %1021 = vmatprep.subr.bf16.mxu0 0
        %1022 = vmatpush2.bf16.msra.mxu0 0
        %1023 = vmatprep.subr.bf16.mxu0 0
        %1024 = vmatpush2.bf16.msra.mxu0 0
        %1025 = vmatprep.subr.bf16.mxu0 0
        %1026 = vmatpush2.bf16.msra.mxu0 0
        %1027 = vmatprep.subr.bf16.mxu0 0
        %1028 = vmatpush2.bf16.msra.mxu0 0
        %1029 = vmatprep.subr.bf16.mxu0 0
        %1030 = vmatpush2.bf16.msra.mxu0 0
        %1031 = vmatprep.subr.bf16.mxu0 0
        %1032 = vmatpush2.bf16.msra.mxu0 0
        %1033 = vmatprep.subr.bf16.mxu0 0
        %1034 = vmatpush2.bf16.msra.mxu0 0
        %1035 = vmatprep.mubr.bf16.mxu0 0
        %1036 = vmatmul.mubr.bf16.gmra.mxu0 %v998
        %v1037 = vpop.f32.mrf.mxu0
        %v1038 = vadd.f32 0.0, %v1037
        %v1039 = vpop.f32.mrf.mxu0
        %v1040 = vpop.f32.mrf.mxu0
        %v1041 = vpop.f32.mrf.mxu0
        %1042 = vdwg.mxu0
        %v1043 = vadd.f32 %v805, %v1038
        %s1044 = scalar_lea.vmem %s366, 32 [#allocation2]
        %v1045 = vld [vmem:[%s1044] sm:$0xff]
        %v1046 = vld [vmem:[%s1044 + $0x8] sm:$0x7]
        %v1047 = vpack.c.bf16 %v1046, %v1045
        %v1049 = vand.u32 %v1047, %v548
        %1051 = vmatprep.subr.bf16.mxu0 0
        %1052 = vmatpush1.bf16.msra.mxu0 0
        %1053 = vmatprep.subr.bf16.mxu0 0
        %1054 = vmatpush1.bf16.msra.mxu0 0
        %1055 = vmatprep.subr.bf16.mxu0 0
        %1056 = vmatpush1.bf16.msra.mxu0 0
        %1057 = vmatprep.subr.bf16.mxu0 0
        %1058 = vmatpush1.bf16.msra.mxu0 0
        %1059 = vmatprep.subr.bf16.mxu0 0
        %1060 = vmatpush1.bf16.msra.mxu0 0
        %1061 = vmatprep.subr.bf16.mxu0 0
        %1062 = vmatpush1.bf16.msra.mxu0 0
        %1063 = vmatprep.subr.bf16.mxu0 0
        %1064 = vmatpush1.bf16.msra.mxu0 0
        %1065 = vmatprep.subr.bf16.mxu0 0
        %1066 = vmatpush1.bf16.msra.mxu0 %v1049
        %1067 = vmatprep.subr.bf16.mxu0 0
        %1068 = vmatpush2.bf16.msra.mxu0 0
        %1069 = vmatprep.subr.bf16.mxu0 0
        %1070 = vmatpush2.bf16.msra.mxu0 0
        %1071 = vmatprep.subr.bf16.mxu0 0
        %1072 = vmatpush2.bf16.msra.mxu0 0
        %1073 = vmatprep.subr.bf16.mxu0 0
        %1074 = vmatpush2.bf16.msra.mxu0 0
        %1075 = vmatprep.subr.bf16.mxu0 0
        %1076 = vmatpush2.bf16.msra.mxu0 0
        %1077 = vmatprep.subr.bf16.mxu0 0
        %1078 = vmatpush2.bf16.msra.mxu0 0
        %1079 = vmatprep.subr.bf16.mxu0 0
        %1080 = vmatpush2.bf16.msra.mxu0 0
        %1081 = vmatprep.subr.bf16.mxu0 0
        %1082 = vmatpush2.bf16.msra.mxu0 0
        %1083 = vmatprep.mubr.bf16.mxu0 0
        %1084 = vmatmul.mubr.bf16.gmra.mxu0 %v534
        %v1085 = vpop.f32.mrf.mxu0
        %v1086 = vadd.f32 %v432, %v1085
        %v1087 = vpop.f32.mrf.mxu0
        %v1088 = vpop.f32.mrf.mxu0
        %v1089 = vadd.f32 %v437, %v1088
        %v1090 = vpop.f32.mrf.mxu0
        %1091 = vmatprep.mubr.bf16.mxu0 0
        %1092 = vmatmul.mubr.bf16.gmra.mxu0 %v537
        %v1093 = vpop.f32.mrf.mxu0
        %v1094 = vadd.f32 %v442, %v1093
        %v1095 = vpop.f32.mrf.mxu0
        %v1096 = vpop.f32.mrf.mxu0
        %v1097 = vadd.f32 %v447, %v1096
        %v1098 = vpop.f32.mrf.mxu0
        %1099 = vmatprep.mubr.bf16.mxu0 0
        %1100 = vmatmul.mubr.bf16.gmra.mxu0 %v540
        %v1101 = vpop.f32.mrf.mxu0
        %v1102 = vadd.f32 %v452, %v1101
        %v1103 = vpop.f32.mrf.mxu0
        %v1104 = vpop.f32.mrf.mxu0
        %v1105 = vadd.f32 %v457, %v1104
        %v1106 = vpop.f32.mrf.mxu0
        %1107 = vmatprep.mubr.bf16.mxu0 0
        %1108 = vmatmul.mubr.bf16.gmra.mxu0 %v543
        %v1109 = vpop.f32.mrf.mxu0
        %v1110 = vadd.f32 %v462, %v1109
        %v1111 = vpop.f32.mrf.mxu0
        %v1112 = vpop.f32.mrf.mxu0
        %v1113 = vadd.f32 %v467, %v1112
        %v1114 = vpop.f32.mrf.mxu0
        %1115 = vdwg.mxu0
        %vm1116 = vcmp.gt.f32.partialorder %v1086, 0.0
        %vm1117 = vcmp.gt.f32.partialorder %v1089, 0.0
        %vm1118 = vcmp.gt.f32.partialorder %v1094, 0.0
        %vm1119 = vcmp.gt.f32.partialorder %v1097, 0.0
        %vm1120 = vcmp.gt.f32.partialorder %v1102, 0.0
        %vm1121 = vcmp.gt.f32.partialorder %v1105, 0.0
        %vm1122 = vcmp.gt.f32.partialorder %v1110, 0.0
        %vm1123 = vcmp.gt.f32.partialorder %v1113, 0.0
        %v1124 = vmul.f32 %v1086, 0.1
        %v1125 = vmul.f32 %v1089, 0.1
        %v1126 = vmul.f32 %v1094, 0.1
        %v1127 = vmul.f32 %v1097, 0.1
        %v1128 = vmul.f32 %v1102, 0.1
        %v1129 = vmul.f32 %v1105, 0.1
        %v1130 = vmul.f32 %v1110, 0.1
        %v1131 = vmul.f32 %v1113, 0.1
        %v1132 = vsel %vm1116, %v1086, %v1124
        %v1133 = vsel %vm1117, %v1089, %v1125
        %v1134 = vsel %vm1118, %v1094, %v1126
        %v1135 = vsel %vm1119, %v1097, %v1127
        %v1136 = vsel %vm1120, %v1102, %v1128
        %v1137 = vsel %vm1121, %v1105, %v1129
        %v1138 = vsel %vm1122, %v1110, %v1130
        %v1139 = vsel %vm1123, %v1113, %v1131
        %v1140 = vadd.f32 %v1132, %v1133
        %v1141 = vadd.f32 %v1140, %v1134
        %v1142 = vadd.f32 %v1141, %v1135
        %v1143 = vadd.f32 %v1142, %v1136
        %v1144 = vadd.f32 %v1143, %v1137
        %v1145 = vadd.f32 %v1144, %v1138
        %v1146 = vadd.f32 %v1145, %v1139
        %v1147 = vmul.f32 %v1146, 0.125
        %s1148 = scalar_lea.vmem %s400, 16 [#allocation5]
        %1149 = vst [vmem:[%s1148] sm:$0xff] %v1147
        %v1150 = vpack.c.bf16 %v1133, %v1132
        %v1151 = vpack.c.bf16 %v1135, %v1134
        %v1152 = vpack.c.bf16 %v1137, %v1136
        %v1153 = vpack.c.bf16 %v1139, %v1138
        %1154 = vmatprep.subr.bf16.mxu0 0
        %1155 = vmatpush1.bf16.msra.mxu0 0
        %1156 = vmatprep.subr.bf16.mxu0 0
        %1157 = vmatpush1.bf16.msra.mxu0 0
        %1158 = vmatprep.subr.bf16.mxu0 0
        %1159 = vmatpush1.bf16.msra.mxu0 0
        %1160 = vmatprep.subr.bf16.mxu0 0
        %1161 = vmatpush1.bf16.msra.mxu0 0
        %1162 = vmatprep.subr.bf16.mxu0 0
        %1163 = vmatpush1.bf16.msra.mxu0 %v1153
        %1164 = vmatprep.subr.bf16.mxu0 0
        %1165 = vmatpush1.bf16.msra.mxu0 %v1152
        %1166 = vmatprep.subr.bf16.mxu0 0
        %1167 = vmatpush1.bf16.msra.mxu0 %v1151
        %1168 = vmatprep.subr.bf16.mxu0 0
        %1169 = vmatpush1.bf16.msra.mxu0 %v1150
        %1170 = vmatprep.subr.bf16.mxu0 0
        %1171 = vmatpush2.bf16.msra.mxu0 0
        %1172 = vmatprep.subr.bf16.mxu0 0
        %1173 = vmatpush2.bf16.msra.mxu0 0
        %1174 = vmatprep.subr.bf16.mxu0 0
        %1175 = vmatpush2.bf16.msra.mxu0 0
        %1176 = vmatprep.subr.bf16.mxu0 0
        %1177 = vmatpush2.bf16.msra.mxu0 0
        %1178 = vmatprep.subr.bf16.mxu0 0
        %1179 = vmatpush2.bf16.msra.mxu0 0
        %1180 = vmatprep.subr.bf16.mxu0 0
        %1181 = vmatpush2.bf16.msra.mxu0 0
        %1182 = vmatprep.subr.bf16.mxu0 0
        %1183 = vmatpush2.bf16.msra.mxu0 0
        %1184 = vmatprep.subr.bf16.mxu0 0
        %1185 = vmatpush2.bf16.msra.mxu0 0
        %1186 = vmatprep.mubr.bf16.mxu0 0
        %1187 = vmatmul.mubr.bf16.gmra.mxu0 %v669
        %v1188 = vpop.f32.mrf.mxu0
        %v1189 = vadd.f32 %v477, %v1188
        %v1190 = vpop.f32.mrf.mxu0
        %v1191 = vpop.f32.mrf.mxu0
        %v1192 = vadd.f32 %v482, %v1191
        %v1193 = vpop.f32.mrf.mxu0
        %1194 = vmatprep.mubr.bf16.mxu0 0
        %1195 = vmatmul.mubr.bf16.gmra.mxu0 %v672
        %v1196 = vpop.f32.mrf.mxu0
        %v1197 = vadd.f32 %v487, %v1196
        %v1198 = vpop.f32.mrf.mxu0
        %v1199 = vpop.f32.mrf.mxu0
        %v1200 = vadd.f32 %v492, %v1199
        %v1201 = vpop.f32.mrf.mxu0
        %1202 = vmatprep.mubr.bf16.mxu0 0
        %1203 = vmatmul.mubr.bf16.gmra.mxu0 %v675
        %v1204 = vpop.f32.mrf.mxu0
        %v1205 = vadd.f32 %v497, %v1204
        %v1206 = vpop.f32.mrf.mxu0
        %v1207 = vpop.f32.mrf.mxu0
        %v1208 = vpop.f32.mrf.mxu0
        %1209 = vdwg.mxu0
        %vm1210 = vcmp.gt.f32.partialorder %v1189, 0.0
        %vm1211 = vcmp.gt.f32.partialorder %v1192, 0.0
        %vm1212 = vcmp.gt.f32.partialorder %v1197, 0.0
        %vm1213 = vcmp.gt.f32.partialorder %v1200, 0.0
        %vm1214 = vcmp.gt.f32.partialorder %v1205, 0.0
        %v1215 = vmul.f32 %v1189, 0.1
        %v1216 = vmul.f32 %v1192, 0.1
        %v1217 = vmul.f32 %v1197, 0.1
        %v1218 = vmul.f32 %v1200, 0.1
        %v1219 = vmul.f32 %v1205, 0.1
        %v1220 = vsel %vm1210, %v1189, %v1215
        %v1221 = vsel %vm1211, %v1192, %v1216
        %v1222 = vsel %vm1212, %v1197, %v1217
        %v1223 = vsel %vm1213, %v1200, %v1218
        %v1224 = vsel %vm1214, %v1205, %v1219
        %v1225 = vadd.f32 %v1220, %v1221
        %v1226 = vadd.f32 %v1225, %v1222
        %v1227 = vadd.f32 %v1226, %v1223
        %v1228 = vadd.f32 %v1227, %v1224
        %v1229 = vmul.f32 %v1228, 0.2
        %s1230 = scalar_lea.vmem %s406, 16 [#allocation6]
        %1231 = vst [vmem:[%s1230] sm:$0xff] %v1229
        %v1232 = vpack.c.bf16 %v1221, %v1220
        %v1233 = vpack.c.bf16 %v1223, %v1222
        %v1234 = vpack.c.bf16 %v1224, %v1224
        %v1236 = vsel %vm757, %v501, 0
        %v1239 = vsel %vm761, %v1234, 0
        %1241 = vmatprep.subr.bf16.mxu0 0
        %1242 = vmatpush1.bf16.msra.mxu0 0
        %1243 = vmatprep.subr.bf16.mxu0 0
        %1244 = vmatpush1.bf16.msra.mxu0 0
        %1245 = vmatprep.subr.bf16.mxu0 0
        %1246 = vmatpush1.bf16.msra.mxu0 0
        %1247 = vmatprep.subr.bf16.mxu0 0
        %1248 = vmatpush1.bf16.msra.mxu0 0
        %1249 = vmatprep.subr.bf16.mxu0 0
        %1250 = vmatpush1.bf16.msra.mxu0 0
        %1251 = vmatprep.subr.bf16.mxu0 0
        %1252 = vmatpush1.bf16.msra.mxu0 %v1239
        %1253 = vmatprep.subr.bf16.mxu0 0
        %1254 = vmatpush1.bf16.msra.mxu0 %v1233
        %1255 = vmatprep.subr.bf16.mxu0 0
        %1256 = vmatpush1.bf16.msra.mxu0 %v1232
        %1257 = vmatprep.subr.bf16.mxu0 0
        %1258 = vmatpush2.bf16.msra.mxu0 0
        %1259 = vmatprep.subr.bf16.mxu0 0
        %1260 = vmatpush2.bf16.msra.mxu0 0
        %1261 = vmatprep.subr.bf16.mxu0 0
        %1262 = vmatpush2.bf16.msra.mxu0 0
        %1263 = vmatprep.subr.bf16.mxu0 0
        %1264 = vmatpush2.bf16.msra.mxu0 0
        %1265 = vmatprep.subr.bf16.mxu0 0
        %1266 = vmatpush2.bf16.msra.mxu0 0
        %1267 = vmatprep.subr.bf16.mxu0 0
        %1268 = vmatpush2.bf16.msra.mxu0 0
        %1269 = vmatprep.subr.bf16.mxu0 0
        %1270 = vmatpush2.bf16.msra.mxu0 0
        %1271 = vmatprep.subr.bf16.mxu0 0
        %1272 = vmatpush2.bf16.msra.mxu0 0
        %1273 = vmatprep.mubr.bf16.mxu0 0
        %1274 = vmatmul.mubr.bf16.gmra.mxu0 %v1236
        %v1275 = vpop.f32.mrf.mxu0
        %v1276 = vadd.f32 0.0, %v1275
        %v1277 = vpop.f32.mrf.mxu0
        %v1278 = vpop.f32.mrf.mxu0
        %v1279 = vpop.f32.mrf.mxu0
        %1280 = vdwg.mxu0
        %v1281 = vadd.f32 %v1043, %v1276
        %s1282 = scalar_lea.vmem %s366, 48 [#allocation2]
        %v1283 = vld [vmem:[%s1282] sm:$0xff]
        %v1284 = vld [vmem:[%s1282 + $0x8] sm:$0x7]
        %v1285 = vpack.c.bf16 %v1284, %v1283
        %v1287 = vand.u32 %v1285, %v548
        %1289 = vmatprep.subr.bf16.mxu0 0
        %1290 = vmatpush1.bf16.msra.mxu0 0
        %1291 = vmatprep.subr.bf16.mxu0 0
        %1292 = vmatpush1.bf16.msra.mxu0 0
        %1293 = vmatprep.subr.bf16.mxu0 0
        %1294 = vmatpush1.bf16.msra.mxu0 0
        %1295 = vmatprep.subr.bf16.mxu0 0
        %1296 = vmatpush1.bf16.msra.mxu0 0
        %1297 = vmatprep.subr.bf16.mxu0 0
        %1298 = vmatpush1.bf16.msra.mxu0 0
        %1299 = vmatprep.subr.bf16.mxu0 0
        %1300 = vmatpush1.bf16.msra.mxu0 0
        %1301 = vmatprep.subr.bf16.mxu0 0
        %1302 = vmatpush1.bf16.msra.mxu0 0
        %1303 = vmatprep.subr.bf16.mxu0 0
        %1304 = vmatpush1.bf16.msra.mxu0 %v1287
        %1305 = vmatprep.subr.bf16.mxu0 0
        %1306 = vmatpush2.bf16.msra.mxu0 0
        %1307 = vmatprep.subr.bf16.mxu0 0
        %1308 = vmatpush2.bf16.msra.mxu0 0
        %1309 = vmatprep.subr.bf16.mxu0 0
        %1310 = vmatpush2.bf16.msra.mxu0 0
        %1311 = vmatprep.subr.bf16.mxu0 0
        %1312 = vmatpush2.bf16.msra.mxu0 0
        %1313 = vmatprep.subr.bf16.mxu0 0
        %1314 = vmatpush2.bf16.msra.mxu0 0
        %1315 = vmatprep.subr.bf16.mxu0 0
        %1316 = vmatpush2.bf16.msra.mxu0 0
        %1317 = vmatprep.subr.bf16.mxu0 0
        %1318 = vmatpush2.bf16.msra.mxu0 0
        %1319 = vmatprep.subr.bf16.mxu0 0
        %1320 = vmatpush2.bf16.msra.mxu0 0
        %1321 = vmatprep.mubr.bf16.mxu0 0
        %1322 = vmatmul.mubr.bf16.gmra.mxu0 %v534
        %v1323 = vpop.f32.mrf.mxu0
        %v1324 = vadd.f32 %v432, %v1323
        %v1325 = vpop.f32.mrf.mxu0
        %v1326 = vpop.f32.mrf.mxu0
        %v1327 = vadd.f32 %v437, %v1326
        %v1328 = vpop.f32.mrf.mxu0
        %1329 = vmatprep.mubr.bf16.mxu0 0
        %1330 = vmatmul.mubr.bf16.gmra.mxu0 %v537
        %v1331 = vpop.f32.mrf.mxu0
        %v1332 = vadd.f32 %v442, %v1331
        %v1333 = vpop.f32.mrf.mxu0
        %v1334 = vpop.f32.mrf.mxu0
        %v1335 = vadd.f32 %v447, %v1334
        %v1336 = vpop.f32.mrf.mxu0
        %1337 = vmatprep.mubr.bf16.mxu0 0
        %1338 = vmatmul.mubr.bf16.gmra.mxu0 %v540
        %v1339 = vpop.f32.mrf.mxu0
        %v1340 = vadd.f32 %v452, %v1339
        %v1341 = vpop.f32.mrf.mxu0
        %v1342 = vpop.f32.mrf.mxu0
        %v1343 = vadd.f32 %v457, %v1342
        %v1344 = vpop.f32.mrf.mxu0
        %1345 = vmatprep.mubr.bf16.mxu0 0
        %1346 = vmatmul.mubr.bf16.gmra.mxu0 %v543
        %v1347 = vpop.f32.mrf.mxu0
        %v1348 = vadd.f32 %v462, %v1347
        %v1349 = vpop.f32.mrf.mxu0
        %v1350 = vpop.f32.mrf.mxu0
        %v1351 = vadd.f32 %v467, %v1350
        %v1352 = vpop.f32.mrf.mxu0
        %1353 = vdwg.mxu0
        %vm1354 = vcmp.gt.f32.partialorder %v1324, 0.0
        %vm1355 = vcmp.gt.f32.partialorder %v1327, 0.0
        %vm1356 = vcmp.gt.f32.partialorder %v1332, 0.0
        %vm1357 = vcmp.gt.f32.partialorder %v1335, 0.0
        %vm1358 = vcmp.gt.f32.partialorder %v1340, 0.0
        %vm1359 = vcmp.gt.f32.partialorder %v1343, 0.0
        %vm1360 = vcmp.gt.f32.partialorder %v1348, 0.0
        %vm1361 = vcmp.gt.f32.partialorder %v1351, 0.0
        %v1362 = vmul.f32 %v1324, 0.1
        %v1363 = vmul.f32 %v1327, 0.1
        %v1364 = vmul.f32 %v1332, 0.1
        %v1365 = vmul.f32 %v1335, 0.1
        %v1366 = vmul.f32 %v1340, 0.1
        %v1367 = vmul.f32 %v1343, 0.1
        %v1368 = vmul.f32 %v1348, 0.1
        %v1369 = vmul.f32 %v1351, 0.1
        %v1370 = vsel %vm1354, %v1324, %v1362
        %v1371 = vsel %vm1355, %v1327, %v1363
        %v1372 = vsel %vm1356, %v1332, %v1364
        %v1373 = vsel %vm1357, %v1335, %v1365
        %v1374 = vsel %vm1358, %v1340, %v1366
        %v1375 = vsel %vm1359, %v1343, %v1367
        %v1376 = vsel %vm1360, %v1348, %v1368
        %v1377 = vsel %vm1361, %v1351, %v1369
        %v1378 = vadd.f32 %v1370, %v1371
        %v1379 = vadd.f32 %v1378, %v1372
        %v1380 = vadd.f32 %v1379, %v1373
        %v1381 = vadd.f32 %v1380, %v1374
        %v1382 = vadd.f32 %v1381, %v1375
        %v1383 = vadd.f32 %v1382, %v1376
        %v1384 = vadd.f32 %v1383, %v1377
        %v1385 = vmul.f32 %v1384, 0.125
        %s1386 = scalar_lea.vmem %s400, 24 [#allocation5]
        %1387 = vst [vmem:[%s1386] sm:$0xff] %v1385
        %v1388 = vpack.c.bf16 %v1371, %v1370
        %v1389 = vpack.c.bf16 %v1373, %v1372
        %v1390 = vpack.c.bf16 %v1375, %v1374
        %v1391 = vpack.c.bf16 %v1377, %v1376
        %1392 = vmatprep.subr.bf16.mxu0 0
        %1393 = vmatpush1.bf16.msra.mxu0 0
        %1394 = vmatprep.subr.bf16.mxu0 0
        %1395 = vmatpush1.bf16.msra.mxu0 0
        %1396 = vmatprep.subr.bf16.mxu0 0
        %1397 = vmatpush1.bf16.msra.mxu0 0
        %1398 = vmatprep.subr.bf16.mxu0 0
        %1399 = vmatpush1.bf16.msra.mxu0 0
        %1400 = vmatprep.subr.bf16.mxu0 0
        %1401 = vmatpush1.bf16.msra.mxu0 %v1391
        %1402 = vmatprep.subr.bf16.mxu0 0
        %1403 = vmatpush1.bf16.msra.mxu0 %v1390
        %1404 = vmatprep.subr.bf16.mxu0 0
        %1405 = vmatpush1.bf16.msra.mxu0 %v1389
        %1406 = vmatprep.subr.bf16.mxu0 0
        %1407 = vmatpush1.bf16.msra.mxu0 %v1388
        %1408 = vmatprep.subr.bf16.mxu0 0
        %1409 = vmatpush2.bf16.msra.mxu0 0
        %1410 = vmatprep.subr.bf16.mxu0 0
        %1411 = vmatpush2.bf16.msra.mxu0 0
        %1412 = vmatprep.subr.bf16.mxu0 0
        %1413 = vmatpush2.bf16.msra.mxu0 0
        %1414 = vmatprep.subr.bf16.mxu0 0
        %1415 = vmatpush2.bf16.msra.mxu0 0
        %1416 = vmatprep.subr.bf16.mxu0 0
        %1417 = vmatpush2.bf16.msra.mxu0 0
        %1418 = vmatprep.subr.bf16.mxu0 0
        %1419 = vmatpush2.bf16.msra.mxu0 0
        %1420 = vmatprep.subr.bf16.mxu0 0
        %1421 = vmatpush2.bf16.msra.mxu0 0
        %1422 = vmatprep.subr.bf16.mxu0 0
        %1423 = vmatpush2.bf16.msra.mxu0 0
        %1424 = vmatprep.mubr.bf16.mxu0 0
        %1425 = vmatmul.mubr.bf16.gmra.mxu0 %v669
        %v1426 = vpop.f32.mrf.mxu0
        %v1427 = vadd.f32 %v477, %v1426
        %v1428 = vpop.f32.mrf.mxu0
        %v1429 = vpop.f32.mrf.mxu0
        %v1430 = vadd.f32 %v482, %v1429
        %v1431 = vpop.f32.mrf.mxu0
        %1432 = vmatprep.mubr.bf16.mxu0 0
        %1433 = vmatmul.mubr.bf16.gmra.mxu0 %v672
        %v1434 = vpop.f32.mrf.mxu0
        %v1435 = vadd.f32 %v487, %v1434
        %v1436 = vpop.f32.mrf.mxu0
        %v1437 = vpop.f32.mrf.mxu0
        %v1438 = vadd.f32 %v492, %v1437
        %v1439 = vpop.f32.mrf.mxu0
        %1440 = vmatprep.mubr.bf16.mxu0 0
        %1441 = vmatmul.mubr.bf16.gmra.mxu0 %v675
        %v1442 = vpop.f32.mrf.mxu0
        %v1443 = vadd.f32 %v497, %v1442
        %v1444 = vpop.f32.mrf.mxu0
        %v1445 = vpop.f32.mrf.mxu0
        %v1446 = vpop.f32.mrf.mxu0
        %1447 = vdwg.mxu0
        %vm1448 = vcmp.gt.f32.partialorder %v1427, 0.0
        %vm1449 = vcmp.gt.f32.partialorder %v1430, 0.0
        %vm1450 = vcmp.gt.f32.partialorder %v1435, 0.0
        %vm1451 = vcmp.gt.f32.partialorder %v1438, 0.0
        %vm1452 = vcmp.gt.f32.partialorder %v1443, 0.0
        %v1453 = vmul.f32 %v1427, 0.1
        %v1454 = vmul.f32 %v1430, 0.1
        %v1455 = vmul.f32 %v1435, 0.1
        %v1456 = vmul.f32 %v1438, 0.1
        %v1457 = vmul.f32 %v1443, 0.1
        %v1458 = vsel %vm1448, %v1427, %v1453
        %v1459 = vsel %vm1449, %v1430, %v1454
        %v1460 = vsel %vm1450, %v1435, %v1455
        %v1461 = vsel %vm1451, %v1438, %v1456
        %v1462 = vsel %vm1452, %v1443, %v1457
        %v1463 = vadd.f32 %v1458, %v1459
        %v1464 = vadd.f32 %v1463, %v1460
        %v1465 = vadd.f32 %v1464, %v1461
        %v1466 = vadd.f32 %v1465, %v1462
        %v1467 = vmul.f32 %v1466, 0.2
        %s1468 = scalar_lea.vmem %s406, 24 [#allocation6]
        %1469 = vst [vmem:[%s1468] sm:$0xff] %v1467
        %v1470 = vpack.c.bf16 %v1459, %v1458
        %v1471 = vpack.c.bf16 %v1461, %v1460
        %v1472 = vpack.c.bf16 %v1462, %v1462
        %v1474 = vsel %vm757, %v502, 0
        %v1477 = vsel %vm761, %v1472, 0
        %1479 = vmatprep.subr.bf16.mxu0 0
        %1480 = vmatpush1.bf16.msra.mxu0 0
        %1481 = vmatprep.subr.bf16.mxu0 0
        %1482 = vmatpush1.bf16.msra.mxu0 0
        %1483 = vmatprep.subr.bf16.mxu0 0
        %1484 = vmatpush1.bf16.msra.mxu0 0
        %1485 = vmatprep.subr.bf16.mxu0 0
        %1486 = vmatpush1.bf16.msra.mxu0 0
        %1487 = vmatprep.subr.bf16.mxu0 0
        %1488 = vmatpush1.bf16.msra.mxu0 0
        %1489 = vmatprep.subr.bf16.mxu0 0
        %1490 = vmatpush1.bf16.msra.mxu0 %v1477
        %1491 = vmatprep.subr.bf16.mxu0 0
        %1492 = vmatpush1.bf16.msra.mxu0 %v1471
        %1493 = vmatprep.subr.bf16.mxu0 0
        %1494 = vmatpush1.bf16.msra.mxu0 %v1470
        %1495 = vmatprep.subr.bf16.mxu0 0
        %1496 = vmatpush2.bf16.msra.mxu0 0
        %1497 = vmatprep.subr.bf16.mxu0 0
        %1498 = vmatpush2.bf16.msra.mxu0 0
        %1499 = vmatprep.subr.bf16.mxu0 0
        %1500 = vmatpush2.bf16.msra.mxu0 0
        %1501 = vmatprep.subr.bf16.mxu0 0
        %1502 = vmatpush2.bf16.msra.mxu0 0
        %1503 = vmatprep.subr.bf16.mxu0 0
        %1504 = vmatpush2.bf16.msra.mxu0 0
        %1505 = vmatprep.subr.bf16.mxu0 0
        %1506 = vmatpush2.bf16.msra.mxu0 0
        %1507 = vmatprep.subr.bf16.mxu0 0
        %1508 = vmatpush2.bf16.msra.mxu0 0
        %1509 = vmatprep.subr.bf16.mxu0 0
        %1510 = vmatpush2.bf16.msra.mxu0 0
        %1511 = vmatprep.mubr.bf16.mxu0 0
        %1512 = vmatmul.mubr.bf16.gmra.mxu0 %v1474
        %v1513 = vpop.f32.mrf.mxu0
        %v1514 = vadd.f32 0.0, %v1513
        %v1515 = vpop.f32.mrf.mxu0
        %v1516 = vpop.f32.mrf.mxu0
        %v1517 = vpop.f32.mrf.mxu0
        %1518 = vdwg.mxu0
        %v1519 = vadd.f32 %v1281, %v1514
        %1520 = vst [vmem:[%s394] sm:$0x7] %v1519
        %s1521 = sand.u32 %s184, 1
        %s1522 = scalar_lea.sflag [#allocation4], %s1521
        %s1523 = sand.u32 %s184, 1
        %s1524 = smul.addr %s1523, 4
        %s1525 = scalar_lea.vmem [#allocation3], %s1524
        %s1526 = sand.u32 %s210, 1
        %s1527 = sand.u32 %s210, 1
        %s1528 = smul.addr %s1527, 32
        %s1529 = scalar_lea.vmem [#allocation5], %s1528
        %s1530 = sand.u32 %s236, 1
        %s1531 = sand.u32 %s236, 1
        %s1532 = smul.addr %s1531, 32
        %s1533 = scalar_lea.vmem [#allocation6], %s1532
        // Predicated region
        $region87: #{_lambda_.1} parent=81 // pred_check
          %p1534 = pneg %p194
        $region88: #{_lambda_.1} parent=81 // pred_check_branch
          %1536 = sbr.rel (%p1534) target = $region90
        $region89: #{_lambda_.1} parent=81 // pred_region
          %s1538 = ssub.s32 64, 64
          %1539 = vsyncadd %s1522, %s1538
          %s1540 = smul.addr %s24, 64
          %s1541 = scalar_lea.hbm %s7, %s1540
          %s1543 = sshll.u32 %s1525, 4
          %s1544 = int_to_ptr.vmem [resolvable:$true] %s1543
          %1546 = dma.vmem_to_hbm [thread:$0]  %s1544, 64, %s1541, %s1522
        $region90: #{_lambda_.1} parent=81 // pred_fallthru
          _
        // Predicated region
        $region91: #{_lambda_.1} parent=81 // pred_check
          %p1547 = pneg %p220
        $region92: #{_lambda_.1} parent=81 // pred_check_branch
          %1549 = sbr.rel (%p1547) target = $region94
        $region93: #{_lambda_.1} parent=81 // pred_region
          %s1550 = smul.addr %s24, 8
          %s1551 = scalar_lea.vmem %s8, %s1550
          // Predicated region
          $region95: #{_lambda_.1} parent=93 // pred_check
            _
          $region96: #{_lambda_.1} parent=93 // pred_check_branch
            %1553 = sbr.rel (0) target = $region98
          $region97: #{_lambda_.1} parent=93 // pred_region
            // Predicated region
            $region99: #{_lambda_.1} parent=97 // pred_check
              _
            $region100: #{_lambda_.1} parent=97 // pred_check_branch
              %1555 = sbr.rel (0) target = $region102
            $region101: #{_lambda_.1} parent=97 // pred_region
              // Predicated region
              $region114: #{_lambda_.1} parent=101 // pred_check
                _
              $region115: #{_lambda_.1} parent=101 // pred_check_branch
                %1577 = sbr.rel (0) target = $region117
              $region116: #{_lambda_.1} parent=101 // pred_region
                loop: start=0, step=1, limit=1
                $region118: #{_lambda_.1} parent=116 // loop_pre_header
                  _
                $region119: #{_lambda_.1} parent=116 // loop_header
                  %s1579 = sphi 0, %s1583
                  %p1580 = scmp.ge.s32.totalorder %s1579, 1
                  %s1584 = sphi %s1529, %s1529
                  %s1585 = sphi %s1551, %s1551
                $region120: #{_lambda_.1} parent=116 // loop_header_branch
                  %1582 = sbr.rel (%p1580) target = $region124
                $region121: #{_lambda_.1} parent=116 // loop_body
                  %v1586 = vld [vmem:[%s1584] sm:$0xff]
                  %1587 = vst [vmem:[%s1585] sm:$0xff] %v1586
                  %v1588 = vld [vmem:[%s1584 + $0x8] sm:$0xff]
                  %1589 = vst [vmem:[%s1585 + $0x10] sm:$0xff] %v1588
                  %v1590 = vld [vmem:[%s1584 + $0x10] sm:$0xff]
                  %1591 = vst [vmem:[%s1585 + $0x20] sm:$0xff] %v1590
                  %v1592 = vld [vmem:[%s1584 + $0x18] sm:$0xff]
                  %1593 = vst [vmem:[%s1585 + $0x30] sm:$0xff] %v1592
                $region122: #{_lambda_.1} parent=116 // loop_footer
                  %s1583 = sadd.s32 1, %s1579
                $region123: #{_lambda_.1} parent=116 // loop_footer_branch
                  %1578 = sbr.rel target = $region119
                $region124: #{_lambda_.1} parent=116 // loop_exit
                  _
              $region117: #{_lambda_.1} parent=101 // pred_fallthru
                _
              // Predicated region
              $region125: #{_lambda_.1} parent=101 // pred_check
                _
              $region126: #{_lambda_.1} parent=101 // pred_check_branch
                %1595 = sbr.rel target = $region128
              $region127: #{_lambda_.1} parent=101 // pred_region
                _
              $region128: #{_lambda_.1} parent=101 // pred_fallthru
                _
            $region102: #{_lambda_.1} parent=97 // pred_fallthru
              _
            // Predicated region
            $region103: #{_lambda_.1} parent=97 // pred_check
              _
            $region104: #{_lambda_.1} parent=97 // pred_check_branch
              %1557 = sbr.rel target = $region106
            $region105: #{_lambda_.1} parent=97 // pred_region
              %s1559 = ssub.s32 256, 1
              loop: start=0, step=1, limit=1
              $region107: #{_lambda_.1} parent=105 // loop_pre_header
                _
              $region108: #{_lambda_.1} parent=105 // loop_header
                %s1561 = sphi 0, %s1565
                %p1562 = scmp.ge.s32.totalorder %s1561, 1
                %s1566 = sphi %s1529, %s1529
                %s1567 = sphi %s1551, %s1551
              $region109: #{_lambda_.1} parent=105 // loop_header_branch
                %1564 = sbr.rel (%p1562) target = $region113
              $region110: #{_lambda_.1} parent=105 // loop_body
                %v1568 = vld [vmem:[%s1566] sm:%s1559]
                %1569 = vst [vmem:[%s1567] sm:%s1559] %v1568
                %v1570 = vld [vmem:[%s1566 + $0x8] sm:%s1559]
                %1571 = vst [vmem:[%s1567 + $0x10] sm:%s1559] %v1570
                %v1572 = vld [vmem:[%s1566 + $0x10] sm:%s1559]
                %1573 = vst [vmem:[%s1567 + $0x20] sm:%s1559] %v1572
                %v1574 = vld [vmem:[%s1566 + $0x18] sm:%s1559]
                %1575 = vst [vmem:[%s1567 + $0x30] sm:%s1559] %v1574
              $region111: #{_lambda_.1} parent=105 // loop_footer
                %s1565 = sadd.s32 1, %s1561
              $region112: #{_lambda_.1} parent=105 // loop_footer_branch
                %1560 = sbr.rel target = $region108
              $region113: #{_lambda_.1} parent=105 // loop_exit
                _
            $region106: #{_lambda_.1} parent=97 // pred_fallthru
              _
          $region98: #{_lambda_.1} parent=93 // pred_fallthru
            _
          %1596 = vnop
        $region94: #{_lambda_.1} parent=81 // pred_fallthru
          _
        // Predicated region
        $region129: #{_lambda_.1} parent=81 // pred_check
          %p1597 = pneg %p246
        $region130: #{_lambda_.1} parent=81 // pred_check_branch
          %1599 = sbr.rel (%p1597) target = $region132
        $region131: #{_lambda_.1} parent=81 // pred_region
          %s1600 = smul.addr %s24, 8
          %s1601 = scalar_lea.vmem %s9, %s1600
          // Predicated region
          $region133: #{_lambda_.1} parent=131 // pred_check
            _
          $region134: #{_lambda_.1} parent=131 // pred_check_branch
            %1603 = sbr.rel (0) target = $region136
          $region135: #{_lambda_.1} parent=131 // pred_region
            // Predicated region
            $region137: #{_lambda_.1} parent=135 // pred_check
              _
            $region138: #{_lambda_.1} parent=135 // pred_check_branch
              %1605 = sbr.rel (0) target = $region140
            $region139: #{_lambda_.1} parent=135 // pred_region
              // Predicated region
              $region152: #{_lambda_.1} parent=139 // pred_check
                _
              $region153: #{_lambda_.1} parent=139 // pred_check_branch
                %1627 = sbr.rel (0) target = $region155
              $region154: #{_lambda_.1} parent=139 // pred_region
                loop: start=0, step=1, limit=1
                $region156: #{_lambda_.1} parent=154 // loop_pre_header
                  _
                $region157: #{_lambda_.1} parent=154 // loop_header
                  %s1629 = sphi 0, %s1633
                  %p1630 = scmp.ge.s32.totalorder %s1629, 1
                  %s1634 = sphi %s1533, %s1533
                  %s1635 = sphi %s1601, %s1601
                $region158: #{_lambda_.1} parent=154 // loop_header_branch
                  %1632 = sbr.rel (%p1630) target = $region162
                $region159: #{_lambda_.1} parent=154 // loop_body
                  %v1636 = vld [vmem:[%s1634] sm:$0xff]
                  %1637 = vst [vmem:[%s1635] sm:$0xff] %v1636
                  %v1638 = vld [vmem:[%s1634 + $0x8] sm:$0xff]
                  %1639 = vst [vmem:[%s1635 + $0x10] sm:$0xff] %v1638
                  %v1640 = vld [vmem:[%s1634 + $0x10] sm:$0xff]
                  %1641 = vst [vmem:[%s1635 + $0x20] sm:$0xff] %v1640
                  %v1642 = vld [vmem:[%s1634 + $0x18] sm:$0xff]
                  %1643 = vst [vmem:[%s1635 + $0x30] sm:$0xff] %v1642
                $region160: #{_lambda_.1} parent=154 // loop_footer
                  %s1633 = sadd.s32 1, %s1629
                $region161: #{_lambda_.1} parent=154 // loop_footer_branch
                  %1628 = sbr.rel target = $region157
                $region162: #{_lambda_.1} parent=154 // loop_exit
                  _
              $region155: #{_lambda_.1} parent=139 // pred_fallthru
                _
              // Predicated region
              $region163: #{_lambda_.1} parent=139 // pred_check
                _
              $region164: #{_lambda_.1} parent=139 // pred_check_branch
                %1645 = sbr.rel target = $region166
              $region165: #{_lambda_.1} parent=139 // pred_region
                _
              $region166: #{_lambda_.1} parent=139 // pred_fallthru
                _
            $region140: #{_lambda_.1} parent=135 // pred_fallthru
              _
            // Predicated region
            $region141: #{_lambda_.1} parent=135 // pred_check
              _
            $region142: #{_lambda_.1} parent=135 // pred_check_branch
              %1607 = sbr.rel target = $region144
            $region143: #{_lambda_.1} parent=135 // pred_region
              %s1609 = ssub.s32 256, 1
              loop: start=0, step=1, limit=1
              $region145: #{_lambda_.1} parent=143 // loop_pre_header
                _
              $region146: #{_lambda_.1} parent=143 // loop_header
                %s1611 = sphi 0, %s1615
                %p1612 = scmp.ge.s32.totalorder %s1611, 1
                %s1616 = sphi %s1533, %s1533
                %s1617 = sphi %s1601, %s1601
              $region147: #{_lambda_.1} parent=143 // loop_header_branch
                %1614 = sbr.rel (%p1612) target = $region151
              $region148: #{_lambda_.1} parent=143 // loop_body
                %v1618 = vld [vmem:[%s1616] sm:%s1609]
                %1619 = vst [vmem:[%s1617] sm:%s1609] %v1618
                %v1620 = vld [vmem:[%s1616 + $0x8] sm:%s1609]
                %1621 = vst [vmem:[%s1617 + $0x10] sm:%s1609] %v1620
                %v1622 = vld [vmem:[%s1616 + $0x10] sm:%s1609]
                %1623 = vst [vmem:[%s1617 + $0x20] sm:%s1609] %v1622
                %v1624 = vld [vmem:[%s1616 + $0x18] sm:%s1609]
                %1625 = vst [vmem:[%s1617 + $0x30] sm:%s1609] %v1624
              $region149: #{_lambda_.1} parent=143 // loop_footer
                %s1615 = sadd.s32 1, %s1611
              $region150: #{_lambda_.1} parent=143 // loop_footer_branch
                %1610 = sbr.rel target = $region146
              $region151: #{_lambda_.1} parent=143 // loop_exit
                _
            $region144: #{_lambda_.1} parent=135 // pred_fallthru
              _
          $region136: #{_lambda_.1} parent=131 // pred_fallthru
            _
          %1646 = vnop
        $region132: #{_lambda_.1} parent=81 // pred_fallthru
          _
      $region82: #{_lambda_.1} parent=5 // pred_fallthru
        _
      %p1647 = scmp.le.s32.totalorder 2, %s19
      // Predicated region
      $region167: #{_lambda_.1} parent=5 // pred_check
        %p1648 = pneg %p1647
      $region168: #{_lambda_.1} parent=5 // pred_check_branch
        %1650 = sbr.rel (%p1648) target = $region170
      $region169: #{_lambda_.1} parent=5 // pred_region
        %s1651 = ssub.s32 %s19, 2
        // Predicated region
        $region171: #{_lambda_.1} parent=169 // pred_check
          %p1652 = pneg %p200
        $region172: #{_lambda_.1} parent=169 // pred_check_branch
          %1654 = sbr.rel (%p1652) target = $region174
        $region173: #{_lambda_.1} parent=169 // pred_region
          %s1655 = sand.u32 %s185, 1
          %s1656 = scalar_lea.sflag [#allocation4], %s1655
          %s1657 = sand.u32 %s185, 1
          %s1658 = smul.addr %s1657, 4
          %s1659 = scalar_lea.vmem [#allocation3], %s1658
          %1660 = dma.done %s1656, 64
        $region174: #{_lambda_.1} parent=169 // pred_fallthru
          _
        // Predicated region
        $region175: #{_lambda_.1} parent=169 // pred_check
          %p1661 = pneg %p226
        $region176: #{_lambda_.1} parent=169 // pred_check_branch
          %1663 = sbr.rel (%p1661) target = $region178
        $region177: #{_lambda_.1} parent=169 // pred_region
          %s1664 = sand.u32 %s211, 1
          %s1665 = sand.u32 %s211, 1
          %s1666 = smul.addr %s1665, 32
          %s1667 = scalar_lea.vmem [#allocation5], %s1666
        $region178: #{_lambda_.1} parent=169 // pred_fallthru
          _
        // Predicated region
        $region179: #{_lambda_.1} parent=169 // pred_check
          %p1668 = pneg %p252
        $region180: #{_lambda_.1} parent=169 // pred_check_branch
          %1670 = sbr.rel (%p1668) target = $region182
        $region181: #{_lambda_.1} parent=169 // pred_region
          %s1671 = sand.u32 %s237, 1
          %s1672 = sand.u32 %s237, 1
          %s1673 = smul.addr %s1672, 32
          %s1674 = scalar_lea.vmem [#allocation6], %s1673
        $region182: #{_lambda_.1} parent=169 // pred_fallthru
          _
      $region170: #{_lambda_.1} parent=5 // pred_fallthru
        _
    $region6: #{_lambda_.1} parent=1 // loop_footer
      %s23 = sadd.s32 1, %s19
    $region7: #{_lambda_.1} parent=1 // loop_footer_branch
      %18 = sbr.rel target = $region3
    $region8: #{_lambda_.1} parent=1 // loop_exit
      _
    %1675 = vsyncpa [#allocation4], 1
    %s1676 = scalar_lea.sflag [#allocation4], 1
    %1677 = vsyncpa %s1676, 1

</llo_original>
